<compile_context>
chip_gen: v5e
topology: v5e:2x2
jax: 0.10.0
libtpu: 0.0.40
codegen_flags: <defaults>
</compile_context>

<pallas_src>
import functools

import jax
import jax.numpy as jnp
from jax import lax
from jax.experimental import pallas as pl
from jax.experimental.pallas import tpu as pltpu


# ---------------- Kernel 1: attention-pooled global context ----------------
def _context_kernel(style_ref, wmask_ref, bmask_ref, ctx_ref):
    # style_ref: (1, C, HW); wmask_ref: (C, 1); bmask_ref: (1, 1); ctx_ref: (1, C, 1)
    eps = 1e-5
    s = style_ref[0]                                     # (C, HW)
    hw = s.shape[1]
    denom = max(hw - 1, 1)                               # guard HW == 1
    mean = jnp.mean(s, axis=1, keepdims=True)            # (C, 1)
    d = s - mean
    var = jnp.sum(d * d, axis=1, keepdims=True) / denom  # unbiased variance
    inv_std = 1.0 / jnp.sqrt(var + eps)                  # (C, 1), exact
    # Fold 1/std into the conv_mask weight -> no full (C,HW) normalized map.
    w_eff = wmask_ref[...] * inv_std                     # (C, 1)
    logits = jnp.sum(d * w_eff, axis=0, keepdims=True) + bmask_ref[0, 0]  # (1, HW)
    logits = logits - jnp.max(logits, axis=1, keepdims=True)
    e = jnp.exp(logits)
    a = e * (1.0 / jnp.sum(e, axis=1, keepdims=True))    # softmax over spatial
    # context[c] = sum_p style[c, p] * a[p]  (raw style, per the module)
    ctx_ref[...] = jnp.sum(s * a, axis=1, keepdims=True)[None]   # (1, C, 1)


# ---------- Kernel 2: (content + context).view -> mk -> softmax -> mv ----------
def _attn_kernel(ctx_ref, z_ref, wmkT_ref, wmvT_ref, out_ref, *,
                 C, HW, tHW, use_vpu_mk):
    # ctx_ref: (1, 1, C) per-batch context; z_ref/out_ref: (1, tHW, C) rows of
    # content.view(B, HW, C); wmkT_ref: (C, 64); wmvT_ref: (64, C).
    t = pl.program_id(1)
    z = z_ref[0]                                          # (tHW, C)
    ctx = ctx_ref[0]                                      # (1, C)

    # torch's .view(B, HW, C) of y = content + context[:, :, None, None] maps
    # flat element i = p*C + c to NCHW channel i // HW. Rebuild that broadcast
    # here (monotone interval selects; no integer division needed).
    p0 = t * tHW
    rows = lax.broadcasted_iota(jnp.int32, (tHW, C), 0) + p0
    cols = lax.broadcasted_iota(jnp.int32, (tHW, C), 1)
    flat = rows * C + cols                                # (tHW, C) int32
    bc = jnp.zeros((tHW, C), jnp.float32) + ctx[:, 0:1]
    for j in range(1, C):                                 # C is small; unrolled
        bc = jnp.where(flat >= j * HW, ctx[:, j:j + 1], bc)
    zc = z + bc

    # mk: Linear(C -> 64, bias=False). For tiny C the MXU would be ~C/256
    # utilized, so do it as an unrolled VPU broadcast-multiply-accumulate.
    if use_vpu_mk:
        wk = wmkT_ref[...]                                # (C, 64)
        logits = zc[:, 0:1] * wk[0:1, :]
        for c in range(1, C):
            logits = logits + zc[:, c:c + 1] * wk[c:c + 1, :]
    else:
        logits = jnp.dot(zc, wmkT_ref[...], preferred_element_type=jnp.float32)

    # softmax over the 64 hidden dim (+ the module's redundant renorm, kept
    # for parity with the PyTorch forward).
    logits = logits - jnp.max(logits, axis=1, keepdims=True)
    e = jnp.exp(logits)
    attn = e * (1.0 / jnp.sum(e, axis=1, keepdims=True))
    attn = attn * (1.0 / jnp.sum(attn, axis=1, keepdims=True))

    # mv: Linear(64 -> C, bias=False); K=64 is fine on the MXU.
    out_ref[0] = jnp.dot(attn, wmvT_ref[...], preferred_element_type=jnp.float32)


# ---------------- Wrapper ----------------
def _pick_row_tile(hw, c):
    """Row tile for the (B, HW, C) view: multiple of 8, divides HW, <=1MiB,
    preferring a choice that yields >=2 tiles per batch for pipelining."""
    best = None
    for t in (1024, 512, 256, 128, 64, 32, 16, 8):
        if hw % t != 0 or t * c * 4 > (1 << 20):
            continue
        if best is None:
            best = t
        if hw // t >= 2:
            return t
    return best if best is not None else hw


def gcea_block(content, style, wmask, bmask, wmk, wmv):
    """GCEA_Block forward. content/style: (B, C, H, W) f32 (NCHW).
    wmask: (C,1)=conv_mask.weight, bmask: (1,1)=conv_mask.bias,
    wmk: (64,C)=mk.weight, wmv: (C,64)=mv.weight."""
    B, C, H, W = content.shape
    HW = H * W
    f32 = jnp.float32

    # ---- Kernel 1: tiny (B, C, 1) context; style read once from HBM ----
    style_f = style.reshape(B, C, HW)
    ctx = pl.pallas_call(
        _context_kernel,
        out_shape=jax.ShapeDtypeStruct((B, C, 1), f32),
        grid=(B,),
        in_specs=[
            pl.BlockSpec((1, C, HW), lambda b: (b, 0, 0)),
            pl.BlockSpec((C, 1), lambda b: (0, 0)),
            pl.BlockSpec((1, 1), lambda b: (0, 0)),
        ],
        out_specs=pl.BlockSpec((1, C, 1), lambda b: (b, 0, 0)),
        compiler_params=pltpu.CompilerParams(
            dimension_semantics=("parallel",),
            vmem_limit_bytes=48 * 1024 * 1024,
        ),
        cost_estimate=pl.CostEstimate(
            flops=int(8 * B * C * HW),
            transcendentals=int(B * HW),
            bytes_accessed=int(4 * B * C * HW + 4 * B * C),
        ),
    )(style_f, wmask, bmask)

    # ---- Kernel 2: content read once, output written once (no y round trip) ----
    content_z = content.reshape(B, HW, C)   # torch .view: raw reinterpretation
    ctx_in = ctx.reshape(B, 1, C)           # tiny (B*C floats)
    wmkT = wmk.T                            # (C, 64)
    wmvT = wmv.T                            # (64, C)

    tHW = _pick_row_tile(HW, C)
    nT = HW // tHW

    kernel = functools.partial(_attn_kernel, C=C, HW=HW, tHW=tHW,
                               use_vpu_mk=(C <= 16))
    out = pl.pallas_call(
        kernel,
        out_shape=jax.ShapeDtypeStruct((B, HW, C), f32),
        grid=(B, nT),
        in_specs=[
            pl.BlockSpec((1, 1, C), lambda b, t: (b, 0, 0)),
            pl.BlockSpec((1, tHW, C), lambda b, t: (b, t, 0)),
            pl.BlockSpec((C, 64), lambda b, t: (0, 0)),
            pl.BlockSpec((64, C), lambda b, t: (0, 0)),
        ],
        out_specs=pl.BlockSpec((1, tHW, C), lambda b, t: (b, t, 0)),
        compiler_params=pltpu.CompilerParams(
            dimension_semantics=("parallel", "parallel"),
            vmem_limit_bytes=48 * 1024 * 1024,
        ),
        cost_estimate=pl.CostEstimate(
            flops=int(B * HW * (4 * C * 64 + 6 * 64)),
            transcendentals=int(B * HW * 64),
            bytes_accessed=int(2 * 4 * B * HW * C),
        ),
    )(ctx_in, content_z, wmkT, wmvT)

    # torch .view(B, C, H, W) of the contiguous (B, HW, C) result
    return out.reshape(B, C, H, W)


# ---------------- Pure-JAX reference (correctness check) ----------------
def _reference(content, style, wmask, bmask, wmk, wmv):
    B, C, H, W = content.shape
    HW = H * W
    s = style.reshape(B, C, HW)
    mean = s.mean(axis=2, keepdims=True)
    var = s.var(axis=2, ddof=1, keepdims=True) + 1e-5
    fs = (s - mean) / jnp.sqrt(var)
    logits = jnp.einsum("bcp,c->bp", fs, wmask[:, 0]) + bmask[0, 0]
    a = jax.nn.softmax(logits, axis=1)
    context = jnp.einsum("bcp,bp->bc", s, a)
    y = content + context[:, :, None, None]
    z = y.reshape(B, HW, C)
    attn = jax.nn.softmax(z @ wmk.T, axis=2)
    attn = attn / attn.sum(axis=2, keepdims=True)
    out = attn @ wmv.T
    return out.reshape(B, C, H, W)


if __name__ == "__main__":
    B, C, H, W = 2, 4, 16, 16          # inplanes = C = 4
    key = jax.random.PRNGKey(0)
    kc, ks, k1, k2, k3, k4 = jax.random.split(key, 6)

    content = jax.random.normal(kc, (B, C, H, W), jnp.float32)
    style = jax.random.normal(ks, (B, C, H, W), jnp.float32)

    # Parameters (deterministic synthetic init, PyTorch shapes):
    wmask = 0.1 * jax.random.normal(k1, (C, 1), jnp.float32)   # conv_mask.weight (1,C,1,1)->(C,1)
    bmask = 0.1 * jax.random.normal(k2, (1, 1), jnp.float32)   # conv_mask.bias (1,)
    wmk = 0.1 * jax.random.normal(k3, (64, C), jnp.float32)    # mk: Linear(C, 64, bias=False)
    wmv = 0.1 * jax.random.normal(k4, (C, 64), jnp.float32)    # mv: Linear(64, C, bias=False)

    out = jax.jit(gcea_block)(content, style, wmask, bmask, wmk, wmv)
    out = jax.block_until_ready(out)

    ref = _reference(content, style, wmask, bmask, wmk, wmv)
    assert out.shape == (B, C, H, W)
    assert jnp.allclose(out, ref, atol=1e-4, rtol=1e-4), "mismatch vs reference"
    print("KERNEL_OK")
</pallas_src>

<mosaic_0001>
module attributes {stable_mosaic.version = 11 : i64} {
  func.func @_context_kernel(%arg0: i32, %arg1: memref<1x4x256xf32, #tpu.memory_space<vmem>>, %arg2: memref<4x1xf32, #tpu.memory_space<vmem>>, %arg3: memref<1x1xf32, #tpu.memory_space<vmem>>, %arg4: memref<1x4x1xf32, #tpu.memory_space<vmem>>) attributes {dimension_semantics = [#tpu.dimension_semantics<parallel>], iteration_bounds = array<i64: 2>, scalar_prefetch = 0 : i64, scratch_operands = 0 : i64, tpu.core_type = #tpu.core_type<tc>, window_params = [{transform_indices = @transform_0, window_bounds = array<i64: 1, 4, 256>}, {pipeline_mode = #tpu.pipeline_mode<synchronous>, transform_indices = @transform_1, window_bounds = array<i64: 4, 1>}, {pipeline_mode = #tpu.pipeline_mode<synchronous>, transform_indices = @transform_2, window_bounds = array<i64: 1, 1>}, {transform_indices = @transform_3, window_bounds = array<i64: 1, 4, 1>}]} {
    %c0 = arith.constant 0 : index
    %c0_0 = arith.constant 0 : index
    %c0_1 = arith.constant 0 : index
    %0 = vector.load %arg1[%c0, %c0_0, %c0_1] : memref<1x4x256xf32, #tpu.memory_space<vmem>>, vector<1x4x256xf32>
    %1 = vector.shape_cast %0 : vector<1x4x256xf32> to vector<4x256xf32>
    %cst = arith.constant dense<0.000000e+00> : vector<4xf32>
    %2 = vector.multi_reduction <add>, %1, %cst [1] : vector<4x256xf32> to vector<4xf32>
    %3 = vector.shape_cast %2 : vector<4xf32> to vector<4x1xf32>
    %cst_2 = arith.constant 2.560000e+02 : f32
    %4 = vector.broadcast %cst_2 : f32 to vector<4x1xf32>
    %5 = arith.divf %3, %4 : vector<4x1xf32>
    %6 = vector.broadcast %5 : vector<4x1xf32> to vector<4x256xf32>
    %7 = arith.subf %1, %6 : vector<4x256xf32>
    %8 = arith.mulf %7, %7 : vector<4x256xf32>
    %cst_3 = arith.constant dense<0.000000e+00> : vector<4xf32>
    %9 = vector.multi_reduction <add>, %8, %cst_3 [1] : vector<4x256xf32> to vector<4xf32>
    %10 = vector.shape_cast %9 : vector<4xf32> to vector<4x1xf32>
    %cst_4 = arith.constant 2.550000e+02 : f32
    %11 = vector.broadcast %cst_4 : f32 to vector<4x1xf32>
    %12 = arith.divf %10, %11 : vector<4x1xf32>
    %cst_5 = arith.constant 9.99999974E-6 : f32
    %13 = vector.broadcast %cst_5 : f32 to vector<4x1xf32>
    %14 = arith.addf %12, %13 : vector<4x1xf32>
    %15 = math.sqrt %14 : vector<4x1xf32>
    %cst_6 = arith.constant 1.000000e+00 : f32
    %16 = vector.broadcast %cst_6 : f32 to vector<4x1xf32>
    %17 = arith.divf %16, %15 : vector<4x1xf32>
    %c0_7 = arith.constant 0 : index
    %c0_8 = arith.constant 0 : index
    %18 = vector.load %arg2[%c0_7, %c0_8] : memref<4x1xf32, #tpu.memory_space<vmem>>, vector<4x1xf32>
    %19 = arith.mulf %18, %17 : vector<4x1xf32>
    %20 = vector.broadcast %19 : vector<4x1xf32> to vector<4x256xf32>
    %21 = arith.mulf %7, %20 : vector<4x256xf32>
    %cst_9 = arith.constant dense<0.000000e+00> : vector<256xf32>
    %22 = vector.multi_reduction <add>, %21, %cst_9 [0] : vector<4x256xf32> to vector<256xf32>
    %23 = vector.shape_cast %22 : vector<256xf32> to vector<1x256xf32>
    %c0_10 = arith.constant 0 : index
    %c0_11 = arith.constant 0 : index
    %24 = vector.load %arg3[%c0_10, %c0_11] : memref<1x1xf32, #tpu.memory_space<vmem>>, vector<1x1xf32>
    %25 = vector.extract %24[0, 0] : f32 from vector<1x1xf32>
    %26 = vector.broadcast %25 : f32 to vector<1x256xf32>
    %27 = arith.addf %23, %26 : vector<1x256xf32>
    %cst_12 = arith.constant dense<0xFF800000> : vector<1xf32>
    %28 = vector.multi_reduction <maximumf>, %27, %cst_12 [1] : vector<1x256xf32> to vector<1xf32>
    %29 = vector.shape_cast %28 : vector<1xf32> to vector<1x1xf32>
    %30 = vector.broadcast %29 : vector<1x1xf32> to vector<1x256xf32>
    %31 = arith.subf %27, %30 : vector<1x256xf32>
    %32 = math.exp %31 : vector<1x256xf32>
    %cst_13 = arith.constant dense<0.000000e+00> : vector<1xf32>
    %33 = vector.multi_reduction <add>, %32, %cst_13 [1] : vector<1x256xf32> to vector<1xf32>
    %34 = vector.shape_cast %33 : vector<1xf32> to vector<1x1xf32>
    %cst_14 = arith.constant 1.000000e+00 : f32
    %35 = vector.broadcast %cst_14 : f32 to vector<1x1xf32>
    %36 = arith.divf %35, %34 : vector<1x1xf32>
    %37 = vector.broadcast %36 : vector<1x1xf32> to vector<1x256xf32>
    %38 = arith.mulf %32, %37 : vector<1x256xf32>
    %39 = vector.broadcast %38 : vector<1x256xf32> to vector<4x256xf32>
    %40 = arith.mulf %1, %39 : vector<4x256xf32>
    %cst_15 = arith.constant dense<0.000000e+00> : vector<4xf32>
    %41 = vector.multi_reduction <add>, %40, %cst_15 [1] : vector<4x256xf32> to vector<4xf32>
    %42 = vector.shape_cast %41 : vector<4xf32> to vector<4x1xf32>
    %43 = vector.shape_cast %42 : vector<4x1xf32> to vector<1x4x1xf32>
    %c0_16 = arith.constant 0 : index
    %c0_17 = arith.constant 0 : index
    %c0_18 = arith.constant 0 : index
    %44 = vector.load %arg4[%c0_16, %c0_17, %c0_18] : memref<1x4x1xf32, #tpu.memory_space<vmem>>, vector<1x4x1xf32>
    tpu.vector_store %arg4[%c0_16, %c0_17, %c0_18], %43 {strides = array<i32>} : memref<1x4x1xf32, #tpu.memory_space<vmem>>, vector<1x4x1xf32>,
    return
  }
  func.func @transform_0(%arg0: i32) -> (i32, i32, i32) {
    %c0_i32 = arith.constant 0 : i32
    %c0_i32_0 = arith.constant 0 : i32
    %c0_i32_1 = arith.constant 0 : i32
    return %arg0, %c0_i32, %c0_i32_0 : i32, i32, i32
  }
  func.func @transform_1(%arg0: i32) -> (i32, i32) {
    %c0_i32 = arith.constant 0 : i32
    %c0_i32_0 = arith.constant 0 : i32
    %c0_i32_1 = arith.constant 0 : i32
    return %c0_i32, %c0_i32_0 : i32, i32
  }
  func.func @transform_2(%arg0: i32) -> (i32, i32) {
    %c0_i32 = arith.constant 0 : i32
    %c0_i32_0 = arith.constant 0 : i32
    %c0_i32_1 = arith.constant 0 : i32
    return %c0_i32, %c0_i32_0 : i32, i32
  }
  func.func @transform_3(%arg0: i32) -> (i32, i32, i32) {
    %c0_i32 = arith.constant 0 : i32
    %c0_i32_0 = arith.constant 0 : i32
    %c0_i32_1 = arith.constant 0 : i32
    return %arg0, %c0_i32, %c0_i32_0 : i32, i32, i32
  }
}

module attributes {stable_mosaic.version = 11 : i64} {
  func.func @_attn_kernel(%arg0: i32, %arg1: i32, %arg2: memref<1x1x4xf32, #tpu.memory_space<vmem>>, %arg3: memref<1x128x4xf32, #tpu.memory_space<vmem>>, %arg4: memref<4x64xf32, #tpu.memory_space<vmem>>, %arg5: memref<64x4xf32, #tpu.memory_space<vmem>>, %arg6: memref<1x128x4xf32, #tpu.memory_space<vmem>>) attributes {dimension_semantics = [#tpu.dimension_semantics<parallel>, #tpu.dimension_semantics<parallel>], iteration_bounds = array<i64: 2, 2>, scalar_prefetch = 0 : i64, scratch_operands = 0 : i64, tpu.core_type = #tpu.core_type<tc>, window_params = [{transform_indices = @transform_0, window_bounds = array<i64: 1, 1, 4>}, {transform_indices = @transform_1, window_bounds = array<i64: 1, 128, 4>}, {pipeline_mode = #tpu.pipeline_mode<synchronous>, transform_indices = @transform_2, window_bounds = array<i64: 4, 64>}, {pipeline_mode = #tpu.pipeline_mode<synchronous>, transform_indices = @transform_3, window_bounds = array<i64: 64, 4>}, {transform_indices = @transform_4, window_bounds = array<i64: 1, 128, 4>}]} {
    %c0 = arith.constant 0 : index
    %c0_0 = arith.constant 0 : index
    %c0_1 = arith.constant 0 : index
    %0 = vector.load %arg3[%c0, %c0_0, %c0_1] : memref<1x128x4xf32, #tpu.memory_space<vmem>>, vector<1x128x4xf32>
    %1 = vector.shape_cast %0 : vector<1x128x4xf32> to vector<128x4xf32>
    %c0_2 = arith.constant 0 : index
    %c0_3 = arith.constant 0 : index
    %c0_4 = arith.constant 0 : index
    %2 = vector.load %arg2[%c0_2, %c0_3, %c0_4] : memref<1x1x4xf32, #tpu.memory_space<vmem>>, vector<1x1x4xf32>
    %3 = vector.shape_cast %2 : vector<1x1x4xf32> to vector<1x4xf32>
    %c128_i32 = arith.constant 128 : i32
    %4 = arith.muli %arg1, %c128_i32 : i32
    %5 = tpu.iota {dimensions = array<i32: 0>} : vector<128x4xi32>
    %6 = vector.broadcast %4 : i32 to vector<128x4xi32>
    %7 = arith.addi %5, %6 : vector<128x4xi32>
    %8 = tpu.iota {dimensions = array<i32: 1>} : vector<128x4xi32>
    %c4_i32 = arith.constant 4 : i32
    %9 = vector.broadcast %c4_i32 : i32 to vector<128x4xi32>
    %10 = arith.muli %7, %9 : vector<128x4xi32>
    %11 = arith.addi %10, %8 : vector<128x4xi32>
    %cst = arith.constant 0.000000e+00 : f32
    %12 = vector.broadcast %cst : f32 to vector<128x4xf32>
    %13 = vector.extract_strided_slice %3 {offsets = [0, 0], sizes = [1, 1], strides = [1, 1]} : vector<1x4xf32> to vector<1x1xf32>
    %14 = vector.broadcast %13 : vector<1x1xf32> to vector<128x4xf32>
    %15 = arith.addf %12, %14 : vector<128x4xf32>
    %c256_i32 = arith.constant 256 : i32
    %16 = vector.broadcast %c256_i32 : i32 to vector<128x4xi32>
    %17 = arith.cmpi sge, %11, %16 : vector<128x4xi32>
    %18 = vector.extract_strided_slice %3 {offsets = [0, 1], sizes = [1, 1], strides = [1, 1]} : vector<1x4xf32> to vector<1x1xf32>
    %19 = vector.shape_cast %18 : vector<1x1xf32> to vector<1x1xf32>
    %20 = vector.broadcast %19 : vector<1x1xf32> to vector<128x4xf32>
    %21 = arith.select %17, %20, %15 : vector<128x4xi1>, vector<128x4xf32>
    %c512_i32 = arith.constant 512 : i32
    %22 = vector.broadcast %c512_i32 : i32 to vector<128x4xi32>
    %23 = arith.cmpi sge, %11, %22 : vector<128x4xi32>
    %24 = vector.extract_strided_slice %3 {offsets = [0, 2], sizes = [1, 1], strides = [1, 1]} : vector<1x4xf32> to vector<1x1xf32>
    %25 = vector.shape_cast %24 : vector<1x1xf32> to vector<1x1xf32>
    %26 = vector.broadcast %25 : vector<1x1xf32> to vector<128x4xf32>
    %27 = arith.select %23, %26, %21 : vector<128x4xi1>, vector<128x4xf32>
    %c768_i32 = arith.constant 768 : i32
    %28 = vector.broadcast %c768_i32 : i32 to vector<128x4xi32>
    %29 = arith.cmpi sge, %11, %28 : vector<128x4xi32>
    %30 = vector.extract_strided_slice %3 {offsets = [0, 3], sizes = [1, 1], strides = [1, 1]} : vector<1x4xf32> to vector<1x1xf32>
    %31 = vector.shape_cast %30 : vector<1x1xf32> to vector<1x1xf32>
    %32 = vector.broadcast %31 : vector<1x1xf32> to vector<128x4xf32>
    %33 = arith.select %29, %32, %27 : vector<128x4xi1>, vector<128x4xf32>
    %34 = arith.addf %1, %33 : vector<128x4xf32>
    %c0_5 = arith.constant 0 : index
    %c0_6 = arith.constant 0 : index
    %35 = vector.load %arg4[%c0_5, %c0_6] : memref<4x64xf32, #tpu.memory_space<vmem>>, vector<4x64xf32>
    %36 = vector.extract_strided_slice %34 {offsets = [0, 0], sizes = [128, 1], strides = [1, 1]} : vector<128x4xf32> to vector<128x1xf32>
    %37 = vector.extract_strided_slice %35 {offsets = [0, 0], sizes = [1, 64], strides = [1, 1]} : vector<4x64xf32> to vector<1x64xf32>
    %38 = vector.broadcast %36 : vector<128x1xf32> to vector<128x64xf32>
    %39 = vector.broadcast %37 : vector<1x64xf32> to vector<128x64xf32>
    %40 = arith.mulf %38, %39 : vector<128x64xf32>
    %41 = vector.extract_strided_slice %34 {offsets = [0, 1], sizes = [128, 1], strides = [1, 1]} : vector<128x4xf32> to vector<128x1xf32>
    %42 = vector.extract_strided_slice %35 {offsets = [1, 0], sizes = [1, 64], strides = [1, 1]} : vector<4x64xf32> to vector<1x64xf32>
    %43 = vector.broadcast %41 : vector<128x1xf32> to vector<128x64xf32>
    %44 = vector.broadcast %42 : vector<1x64xf32> to vector<128x64xf32>
    %45 = arith.mulf %43, %44 : vector<128x64xf32>
    %46 = arith.addf %40, %45 : vector<128x64xf32>
    %47 = vector.extract_strided_slice %34 {offsets = [0, 2], sizes = [128, 1], strides = [1, 1]} : vector<128x4xf32> to vector<128x1xf32>
    %48 = vector.extract_strided_slice %35 {offsets = [2, 0], sizes = [1, 64], strides = [1, 1]} : vector<4x64xf32> to vector<1x64xf32>
    %49 = vector.broadcast %47 : vector<128x1xf32> to vector<128x64xf32>
    %50 = vector.broadcast %48 : vector<1x64xf32> to vector<128x64xf32>
    %51 = arith.mulf %49, %50 : vector<128x64xf32>
    %52 = arith.addf %46, %51 : vector<128x64xf32>
    %53 = vector.extract_strided_slice %34 {offsets = [0, 3], sizes = [128, 1], strides = [1, 1]} : vector<128x4xf32> to vector<128x1xf32>
    %54 = vector.extract_strided_slice %35 {offsets = [3, 0], sizes = [1, 64], strides = [1, 1]} : vector<4x64xf32> to vector<1x64xf32>
    %55 = vector.broadcast %53 : vector<128x1xf32> to vector<128x64xf32>
    %56 = vector.broadcast %54 : vector<1x64xf32> to vector<128x64xf32>
    %57 = arith.mulf %55, %56 : vector<128x64xf32>
    %58 = arith.addf %52, %57 : vector<128x64xf32>
    %cst_7 = arith.constant dense<0xFF800000> : vector<128xf32>
    %59 = vector.multi_reduction <maximumf>, %58, %cst_7 [1] : vector<128x64xf32> to vector<128xf32>
    %60 = vector.shape_cast %59 : vector<128xf32> to vector<128x1xf32>
    %61 = vector.broadcast %60 : vector<128x1xf32> to vector<128x64xf32>
    %62 = arith.subf %58, %61 : vector<128x64xf32>
    %63 = math.exp %62 : vector<128x64xf32>
    %cst_8 = arith.constant dense<0.000000e+00> : vector<128xf32>
    %64 = vector.multi_reduction <add>, %63, %cst_8 [1] : vector<128x64xf32> to vector<128xf32>
    %65 = vector.shape_cast %64 : vector<128xf32> to vector<128x1xf32>
    %cst_9 = arith.constant 1.000000e+00 : f32
    %66 = vector.broadcast %cst_9 : f32 to vector<128x1xf32>
    %67 = arith.divf %66, %65 : vector<128x1xf32>
    %68 = vector.broadcast %67 : vector<128x1xf32> to vector<128x64xf32>
    %69 = arith.mulf %63, %68 : vector<128x64xf32>
    %cst_10 = arith.constant dense<0.000000e+00> : vector<128xf32>
    %70 = vector.multi_reduction <add>, %69, %cst_10 [1] : vector<128x64xf32> to vector<128xf32>
    %71 = vector.shape_cast %70 : vector<128xf32> to vector<128x1xf32>
    %cst_11 = arith.constant 1.000000e+00 : f32
    %72 = vector.broadcast %cst_11 : f32 to vector<128x1xf32>
    %73 = arith.divf %72, %71 : vector<128x1xf32>
    %74 = vector.broadcast %73 : vector<128x1xf32> to vector<128x64xf32>
    %75 = arith.mulf %69, %74 : vector<128x64xf32>
    %c0_12 = arith.constant 0 : index
    %c0_13 = arith.constant 0 : index
    %76 = vector.load %arg5[%c0_12, %c0_13] : memref<64x4xf32, #tpu.memory_space<vmem>>, vector<64x4xf32>
    %cst_14 = arith.constant dense<0.000000e+00> : vector<128x4xf32>
    %77 = tpu.matmul %75, %76, %cst_14 {dimension_numbers = #tpu.dot_dimension_numbers<[1], [0], [0], [1], [0, 0, 1, 1], [], []>} : vector<128x64xf32>, vector<64x4xf32>, vector<128x4xf32> -> vector<128x4xf32>
    %c0_15 = arith.constant 0 : index
    %c0_16 = arith.constant 0 : index
    %c0_17 = arith.constant 0 : index
    %78 = vector.load %arg6[%c0_15, %c0_16, %c0_17] : memref<1x128x4xf32, #tpu.memory_space<vmem>>, vector<1x128x4xf32>
    %79 = vector.shape_cast %78 : vector<1x128x4xf32> to vector<128x4xf32>
    %80 = vector.shape_cast %77 : vector<128x4xf32> to vector<1x128x4xf32>
    tpu.vector_store %arg6[%c0_15, %c0_16, %c0_17], %80 {strides = array<i32>} : memref<1x128x4xf32, #tpu.memory_space<vmem>>, vector<1x128x4xf32>,
    return
  }
  func.func @transform_0(%arg0: i32, %arg1: i32) -> (i32, i32, i32) {
    %c0_i32 = arith.constant 0 : i32
    %c0_i32_0 = arith.constant 0 : i32
    %c0_i32_1 = arith.constant 0 : i32
    return %arg0, %c0_i32, %c0_i32_0 : i32, i32, i32
  }
  func.func @transform_1(%arg0: i32, %arg1: i32) -> (i32, i32, i32) {
    %c0_i32 = arith.constant 0 : i32
    %c0_i32_0 = arith.constant 0 : i32
    return %arg0, %arg1, %c0_i32 : i32, i32, i32
  }
  func.func @transform_2(%arg0: i32, %arg1: i32) -> (i32, i32) {
    %c0_i32 = arith.constant 0 : i32
    %c0_i32_0 = arith.constant 0 : i32
    %c0_i32_1 = arith.constant 0 : i32
    return %c0_i32, %c0_i32_0 : i32, i32
  }
  func.func @transform_3(%arg0: i32, %arg1: i32) -> (i32, i32) {
    %c0_i32 = arith.constant 0 : i32
    %c0_i32_0 = arith.constant 0 : i32
    %c0_i32_1 = arith.constant 0 : i32
    return %c0_i32, %c0_i32_0 : i32, i32
  }
  func.func @transform_4(%arg0: i32, %arg1: i32) -> (i32, i32, i32) {
    %c0_i32 = arith.constant 0 : i32
    %c0_i32_0 = arith.constant 0 : i32
    return %arg0, %arg1, %c0_i32 : i32, i32, i32
  }
}

</mosaic_0001>

<llo_original>
// kernel: gcea_block.2
$region0: #{gcea_block.2}
  #allocation0 [shape = 'u32[]', space=smem, size = 0x4, offset = 0x4, fixed_abs, tag = 'smem constant byte address 0x4 - core index']
  #allocation1 [shape = 'u32[72,128]{1,0:T(1,128)}', space=vmem, size = 0x9000, scoped, tag = 'internal scratch']
  #allocation2 [shape = 'f32[1,1]{1,0:T(1,128)S(1)}', space=vmem, size = 0x200, scoped, tag = 'scoped memory for gcea_block.2']
  %s0 = inlined_call_operand.vmem [shape: f32[2,4,256], index: 0, kind: input, shape index: {}]
  %s1 = inlined_call_operand.vmem [shape: f32[4,1], index: 1, kind: input, shape index: {}]
  %s2 = inlined_call_operand.<no memory space> [shape: f32[1,1], index: 2, kind: input, shape index: {}]
  %s3 = inlined_call_operand.vmem [shape: f32[2,4,1], index: 3, kind: output, shape index: {}]
  %s4 = sld [smem:[#allocation0]]
  $region45: #{gcea_block.2} parent=0
    _
  %s6 = ssub.s32 1, %s4
  %s7 = scalar_select 0, %s6, %s4
  %v8 = vstv %s2
  %9 = vst [vmem:[#allocation2] sm:$0x1] %v8
  loop: start=0, step=1, limit=4
  $region2: #{gcea_block.2} parent=0 // loop_pre_header
    _
  $region3: #{gcea_block.2} parent=0 // loop_header
    %s11 = sphi 0, %s15
    %p12 = scmp.ge.s32.totalorder %s11, 4
    %s21 = sphi 0, %s23
    %s24 = sphi 0, %s21
    %s25 = sphi 0, %s24
    %s41 = sphi 0, %s25
    %s45 = sphi 0, %s45
    %s47 = sphi 0, %s45
    %s48 = sphi 0, %s47
    %s62 = sphi 0, %s48
    %s66 = sphi 0, %s66
    %s68 = sphi 0, %s66
    %s69 = sphi 0, %s68
    %s83 = sphi 0, %s69
    %s89 = sphi 0, %s91
    %s92 = sphi 0, %s89
    %s93 = sphi 0, %s92
    %s109 = sphi 0, %s93
  $region4: #{gcea_block.2} parent=0 // loop_header_branch
    %14 = sbr.rel (%p12) target = $region8
  $region5: #{gcea_block.2} parent=0 // loop_body
    %s16 = ssub.s32 %s11, 1
    %s17 = ssub.s32 %s11, 2
    %s18 = sadd.s32 %s11, 1
    %s19 = ssub.s32 %s11, %s18
    %p20 = scmp.eq.s32.totalorder %s19, 0
    %s22 = sadd.s32 %s21, 1
    %s23 = scalar_select %p20, %s21, %s22
    %p26 = pneg %p20
    %p27 = scmp.eq.s32.totalorder %s11, 1
    %p28 = por %p26, %p27
    %p29 = scmp.ne.s32.totalorder %s21, %s24
    %p30 = scmp.eq.s32.totalorder %s11, 0
    %p31 = por %p29, %p30
    %p32 = scmp.ne.s32.totalorder %s21, %s24
    %p33 = scmp.eq.s32.totalorder %s16, 1
    %p34 = por %p32, %p33
    %p35 = scmp.ne.s32.totalorder %s24, %s25
    %p36 = scmp.eq.s32.totalorder %s16, 0
    %p37 = por %p35, %p36
    %p38 = scmp.ne.s32.totalorder %s24, %s25
    %p39 = scmp.eq.s32.totalorder %s17, 1
    %p40 = por %p38, %p39
    %p42 = scmp.ne.s32.totalorder %s25, %s41
    %p43 = scmp.eq.s32.totalorder %s17, 0
    %p44 = por %p42, %p43
    %s46 = sadd.s32 %s45, 1
    %p49 = scmp.eq.s32.totalorder %s11, 1
    %p50 = scmp.ne.s32.totalorder %s45, %s47
    %p51 = scmp.eq.s32.totalorder %s11, 0
    %p52 = por %p50, %p51
    %p53 = scmp.ne.s32.totalorder %s45, %s47
    %p54 = scmp.eq.s32.totalorder %s16, 1
    %p55 = por %p53, %p54
    %p56 = scmp.ne.s32.totalorder %s47, %s48
    %p57 = scmp.eq.s32.totalorder %s16, 0
    %p58 = por %p56, %p57
    %p59 = scmp.ne.s32.totalorder %s47, %s48
    %p60 = scmp.eq.s32.totalorder %s17, 1
    %p61 = por %p59, %p60
    %p63 = scmp.ne.s32.totalorder %s48, %s62
    %p64 = scmp.eq.s32.totalorder %s17, 0
    %p65 = por %p63, %p64
    %s67 = sadd.s32 %s66, 1
    %p70 = scmp.eq.s32.totalorder %s11, 1
    %p71 = scmp.ne.s32.totalorder %s66, %s68
    %p72 = scmp.eq.s32.totalorder %s11, 0
    %p73 = por %p71, %p72
    %p74 = scmp.ne.s32.totalorder %s66, %s68
    %p75 = scmp.eq.s32.totalorder %s16, 1
    %p76 = por %p74, %p75
    %p77 = scmp.ne.s32.totalorder %s68, %s69
    %p78 = scmp.eq.s32.totalorder %s16, 0
    %p79 = por %p77, %p78
    %p80 = scmp.ne.s32.totalorder %s68, %s69
    %p81 = scmp.eq.s32.totalorder %s17, 1
    %p82 = por %p80, %p81
    %p84 = scmp.ne.s32.totalorder %s69, %s83
    %p85 = scmp.eq.s32.totalorder %s17, 0
    %p86 = por %p84, %p85
    %s87 = ssub.s32 %s11, %s18
    %p88 = scmp.eq.s32.totalorder %s87, 0
    %s90 = sadd.s32 %s89, 1
    %s91 = scalar_select %p88, %s89, %s90
    %p94 = pneg %p88
    %p95 = scmp.eq.s32.totalorder %s11, 1
    %p96 = por %p94, %p95
    %p97 = scmp.ne.s32.totalorder %s89, %s92
    %p98 = scmp.eq.s32.totalorder %s11, 0
    %p99 = por %p97, %p98
    %p100 = scmp.ne.s32.totalorder %s89, %s92
    %p101 = scmp.eq.s32.totalorder %s16, 1
    %p102 = por %p100, %p101
    %p103 = scmp.ne.s32.totalorder %s92, %s93
    %p104 = scmp.eq.s32.totalorder %s16, 0
    %p105 = por %p103, %p104
    %p106 = scmp.ne.s32.totalorder %s92, %s93
    %p107 = scmp.eq.s32.totalorder %s17, 1
    %p108 = por %p106, %p107
    %p110 = scmp.ne.s32.totalorder %s93, %s109
    %p111 = scmp.eq.s32.totalorder %s17, 0
    %p112 = por %p110, %p111
    %p113 = scmp.le.s32.totalorder 1, %s11
    %p114 = scmp.lt.s32.totalorder %s11, 3
    %p115 = pnand %p113, %p114
    %p116 = pneg %p115
    // Predicated region
    $region9: #{gcea_block.2} parent=5 // pred_check
      _
    $region10: #{gcea_block.2} parent=5 // pred_check_branch
      %118 = sbr.rel (%p115) target = $region12
    $region11: #{gcea_block.2} parent=5 // pred_region
      %s119 = ssub.s32 %s11, 1
      // Predicated region
      $region13: #{gcea_block.2} parent=11 // pred_check
        %p120 = pneg %p58
      $region14: #{gcea_block.2} parent=11 // pred_check_branch
        %122 = sbr.rel (%p120) target = $region16
      $region15: #{gcea_block.2} parent=11 // pred_region
        _
      $region16: #{gcea_block.2} parent=11 // pred_fallthru
        _
      // Predicated region
      $region17: #{gcea_block.2} parent=11 // pred_check
        %p123 = pneg %p79
      $region18: #{gcea_block.2} parent=11 // pred_check_branch
        %125 = sbr.rel (%p123) target = $region20
      $region19: #{gcea_block.2} parent=11 // pred_region
        _
      $region20: #{gcea_block.2} parent=11 // pred_fallthru
        _
    $region12: #{gcea_block.2} parent=5 // pred_fallthru
      _
    %p126 = scmp.lt.s32.totalorder %s11, 2
    // Predicated region
    $region21: #{gcea_block.2} parent=5 // pred_check
      %p127 = pneg %p126
    $region22: #{gcea_block.2} parent=5 // pred_check_branch
      %129 = sbr.rel (%p127) target = $region24
    $region23: #{gcea_block.2} parent=5 // pred_region
      // Predicated region
      $region25: #{gcea_block.2} parent=23 // pred_check
        %p130 = pneg %p31
      $region26: #{gcea_block.2} parent=23 // pred_check_branch
        %132 = sbr.rel (%p130) target = $region28
      $region27: #{gcea_block.2} parent=23 // pred_region
        %p133 = scmp.lt.s32.totalorder %s11, 1
        %s134 = scalar_select %p133, %s11, 1
        %s135 = smul.addr %s134, 2
        %s136 = smul.addr %s135, 4
        %s137 = scalar_lea.vmem %s0, %s136
      $region28: #{gcea_block.2} parent=23 // pred_fallthru
        _
    $region24: #{gcea_block.2} parent=5 // pred_fallthru
      _
    %p138 = scmp.le.s32.totalorder 1, %s11
    %p139 = scmp.lt.s32.totalorder %s11, 3
    %p140 = pnand %p138, %p139
    %p141 = pneg %p140
    // Predicated region
    $region29: #{gcea_block.2} parent=5 // pred_check
      _
    $region30: #{gcea_block.2} parent=5 // pred_check_branch
      %143 = sbr.rel (%p140) target = $region32
    $region31: #{gcea_block.2} parent=5 // pred_region
      %s144 = ssub.s32 %s11, 1
      %p145 = scmp.lt.s32.totalorder %s16, 1
      %s146 = scalar_select %p145, %s16, 1
      %s147 = smul.addr %s146, 2
      %s148 = smul.addr %s147, 4
      %s149 = scalar_lea.vmem %s0, %s148
      %p150 = pneg %p37
      %p151 = pneg %p34
      %p152 = pneg %p58
      %p153 = pneg %p55
      %p154 = pneg %p79
      %p155 = pneg %p76
      %p156 = pneg %p105
      %p157 = pneg %p102
      %p158 = scmp.lt.s32.totalorder %s16, 1
      %s159 = scalar_select %p158, %s16, 1
      %s160 = smul.addr %s159, 4
      %s161 = scalar_lea.vmem %s3, %s160
      %p162 = scmp.lt.s32.totalorder %s16, 1
      %s163 = scalar_select %p162, %s16, 1
      %s164 = smul.addr %s163, 2
      %s165 = smul.addr %s164, 4
      %s166 = scalar_lea.vmem %s0, %s165
      %p167 = scmp.lt.s32.totalorder %s16, 1
      %s168 = scalar_select %p167, %s16, 1
      %s169 = smul.addr %s168, 4
      %s170 = scalar_lea.vmem %s3, %s169
      %v171 = vld [vmem:[%s166] sm:$0xff]
      %173 = vst [vmem:[#allocation1] ss:$2 sm:$0xff] %v171
      %v174 = vld.sshfl [vmem:[#allocation1] sm:$0xff pattern:$0x75316420]
      %v175 = vld.sshfl [vmem:[#allocation1 + $0x8] sm:$0xff pattern:$0x75316420]
      %vm178 = vcmask 1043456
      %v179 = vsel %vm178, %v174, 0.0
      %v180 = vsel %vm178, %v175, 0.0
      %v181 = vadd.f32 %v179, %v180
      %182 = vadd.xlane.f32.xlu0 %v181
      %v183 = vpop.xlane.xlu0 %182
      %v184 = vrcp.pop 256.0
      %v185 = vmul.f32 256.0, %v184
      %v186 = vsub.f32 1.0, %v185
      %v187 = vmul.f32 %v184, %v186
      %v188 = vadd.f32 %v184, %v187
      %vm189 = vweird.f32 %v184
      %v190 = vsel %vm189, %v184, %v188
      %v191 = vmul.f32 %v183, %v190
      %v194 = vunpack.c.l.s4 839922192
      %v195 = vunpack.c.0.s8 %v194
      %v196 = vperm.slane %v191, %v195
      %v198 = vsub.f32 %v171, %v196
      %v199 = vmul.f32 %v198, %v198
      %201 = vst [vmem:[#allocation1] ss:$2 sm:$0xff] %v199
      %v202 = vld.sshfl [vmem:[#allocation1] sm:$0xff pattern:$0x75316420]
      %v203 = vld.sshfl [vmem:[#allocation1 + $0x8] sm:$0xff pattern:$0x75316420]
      %v206 = vsel %vm178, %v202, 0.0
      %v207 = vsel %vm178, %v203, 0.0
      %v208 = vadd.f32 %v206, %v207
      %209 = vadd.xlane.f32.xlu0 %v208
      %v210 = vpop.xlane.xlu0 %209
      %v211 = vrcp.pop 255.0
      %v212 = vmul.f32 255.0, %v211
      %v213 = vsub.f32 1.0, %v212
      %v214 = vmul.f32 %v211, %v213
      %v215 = vadd.f32 %v211, %v214
      %vm216 = vweird.f32 %v211
      %v217 = vsel %vm216, %v211, %v215
      %v218 = vmul.f32 %v210, %v217
      %v219 = vadd.f32 %v218, 1e-05
      %v220 = vrsqrt.pop %v219
      %v221 = vmul.f32 %v220, %v219
      %v222 = vmul.f32 %v221, %v220
      %v223 = vmul.f32 0.5, %v222
      %v224 = vsub.f32 1.5, %v223
      %v225 = vmul.f32 %v220, %v224
      %v226 = vmul.f32 %v219, %v225
      %vm227 = vcmp.eq.f32.partialorder %v219, inf
      %v228 = vsel %vm227, %v219, %v226
      %vm229 = vcmp.eq.f32.partialorder %v219, 0.0
      %v230 = vand.u32 %v219, 2147483648
      %v231 = vsel %vm229, %v230, %v228
      %v232 = vrcp.pop %v231
      %v233 = vmul.f32 %v231, %v232
      %v234 = vsub.f32 1.0, %v233
      %v235 = vmul.f32 %v232, %v234
      %v236 = vadd.f32 %v232, %v235
      %vm237 = vweird.f32 %v231
      %vm238 = vweird.f32 %v232
      %vm239 = vmor %vm237, %vm238
      %v240 = vsel %vm239, %v232, %v236
      %v241 = vand.u32 2147483647, %v231
      %vm242 = vcmp.eq.f32.partialorder %v241, 8.507059e+37
      %v243 = vand.u32 %v231, 2147483648
      %v244 = vor.u32 1.1754944e-38, %v243
      %v245 = vsel %vm242, %v244, %v240
      %v246 = vmul.f32 1.0, %v245
      %v247 = vld [vmem:[%s1] sm:$0xf]
      %v248 = vmul.f32 %v247, %v246
      %250 = vset.pattern.permute.xlu0 0
      %251 = vperm.xlu0 %250, %v248
      %v252 = vpop.permute.xlu0 %251
      %v254 = vunpack.c.l.s4 839922192
      %v255 = vunpack.c.0.s8 %v254
      %v256 = vperm.slane %v252, %v255
      %v258 = vmul.f32 %v198, %v256
      %260 = vst [vmem:[#allocation1] ss:$2 sm:$0xff] %v258
      %v261 = vld.sshfl [vmem:[#allocation1] sm:$0xff pattern:$0x75316420]
      %v262 = vld.sshfl [vmem:[#allocation1 + $0x8] sm:$0xff pattern:$0x75316420]
      %v265 = vsel %vm178, %v261, 0.0
      %v266 = vrot.slane %v265, 4
      %v267 = vadd.f32 %v265, %v266
      %v268 = vrot.slane %v267, 2
      %v269 = vadd.f32 %v267, %v268
      %v270 = vrot.slane %v269, 1
      %v271 = vadd.f32 %v269, %v270
      %v272 = vsel %vm178, %v262, 0.0
      %v273 = vrot.slane %v272, 4
      %v274 = vadd.f32 %v272, %v273
      %v275 = vrot.slane %v274, 2
      %v276 = vadd.f32 %v274, %v275
      %v277 = vrot.slane %v276, 1
      %v278 = vadd.f32 %v276, %v277
      %v279 = vld [vmem:[#allocation2] sm:$0x1]
      %s280 = vtos %v279
      %v281 = vstv %s280
      %v282 = vadd.f32 %v271, %v281
      %v283 = vadd.f32 %v278, %v281
      %v284 = vmax.f32 %v282, %v283
      %285 = vmax.xlane.f32.xlu0 %v284
      %v286 = vpop.xlane.xlu0 %285
      %v287 = vsub.f32 %v282, %v286
      %v288 = vsub.f32 %v283, %v286
      %v289 = vmul.f32 %v287, 1.442695
      %v290 = vpow.pop %v289
      %v291 = vmul.f32 %v288, 1.442695
      %v292 = vpow.pop %v291
      %v293 = vadd.f32 %v290, %v292
      %294 = vadd.xlane.f32.xlu0 %v293
      %v295 = vpop.xlane.xlu0 %294
      %v296 = vrcp.pop %v295
      %v297 = vmul.f32 %v295, %v296
      %v298 = vsub.f32 1.0, %v297
      %v299 = vmul.f32 %v296, %v298
      %v300 = vadd.f32 %v296, %v299
      %vm301 = vweird.f32 %v295
      %vm302 = vweird.f32 %v296
      %vm303 = vmor %vm301, %vm302
      %v304 = vsel %vm303, %v296, %v300
      %v305 = vand.u32 2147483647, %v295
      %vm306 = vcmp.eq.f32.partialorder %v305, 8.507059e+37
      %v307 = vand.u32 %v295, 2147483648
      %v308 = vor.u32 1.1754944e-38, %v307
      %v309 = vsel %vm306, %v308, %v304
      %v310 = vmul.f32 1.0, %v309
      %v311 = vmul.f32 %v290, %v310
      %v312 = vmul.f32 %v292, %v310
      %v315 = vrot.slane %v312, 4
      %v316 = vsel %vm178, %v311, %v315
      %v318 = vmul.f32 %v171, %v316
      %320 = vst [vmem:[#allocation1] ss:$2 sm:$0xff] %v318
      %v321 = vld.sshfl [vmem:[#allocation1] sm:$0xff pattern:$0x75316420]
      %v322 = vld.sshfl [vmem:[#allocation1 + $0x8] sm:$0xff pattern:$0x75316420]
      %v325 = vsel %vm178, %v321, 0.0
      %v326 = vsel %vm178, %v322, 0.0
      %v327 = vadd.f32 %v325, %v326
      %328 = vadd.xlane.f32.xlu0 %v327
      %v329 = vpop.xlane.xlu0 %328
      %vm330 = vcmask 3072
      %331 = vst.msk [vmem:[%s170] sm:$0xf] %vm330, %v329
      %p332 = scmp.lt.s32.totalorder %s16, 1
      %s333 = scalar_select %p332, %s16, 1
      %s334 = smul.addr %s333, 4
      %s335 = scalar_lea.vmem %s3, %s334
      // Predicated region
      $region33: #{gcea_block.2} parent=31 // pred_check
        %p336 = pneg %p102
      $region34: #{gcea_block.2} parent=31 // pred_check_branch
        %338 = sbr.rel (%p336) target = $region36
      $region35: #{gcea_block.2} parent=31 // pred_region
        _
      $region36: #{gcea_block.2} parent=31 // pred_fallthru
        _
    $region32: #{gcea_block.2} parent=5 // pred_fallthru
      _
    %p339 = scmp.le.s32.totalorder 2, %s11
    // Predicated region
    $region37: #{gcea_block.2} parent=5 // pred_check
      %p340 = pneg %p339
    $region38: #{gcea_block.2} parent=5 // pred_check_branch
      %342 = sbr.rel (%p340) target = $region40
    $region39: #{gcea_block.2} parent=5 // pred_region
      %s343 = ssub.s32 %s11, 2
      // Predicated region
      $region41: #{gcea_block.2} parent=39 // pred_check
        %p344 = pneg %p108
      $region42: #{gcea_block.2} parent=39 // pred_check_branch
        %346 = sbr.rel (%p344) target = $region44
      $region43: #{gcea_block.2} parent=39 // pred_region
        %p347 = scmp.lt.s32.totalorder %s17, 1
        %s348 = scalar_select %p347, %s17, 1
        %s349 = smul.addr %s348, 4
        %s350 = scalar_lea.vmem %s3, %s349
      $region44: #{gcea_block.2} parent=39 // pred_fallthru
        _
    $region40: #{gcea_block.2} parent=5 // pred_fallthru
      _
  $region6: #{gcea_block.2} parent=0 // loop_footer
    %s15 = sadd.s32 1, %s11
  $region7: #{gcea_block.2} parent=0 // loop_footer_branch
    %10 = sbr.rel target = $region3
  $region8: #{gcea_block.2} parent=0 // loop_exit
    _

// kernel: gcea_block.3
$region0: #{gcea_block.3}
  #allocation0 [shape = 'u32[]', space=smem, size = 0x4, offset = 0x4, fixed_abs, tag = 'smem constant byte address 0x4 - core index']
  #allocation1 [shape = 'u32[72,128]{1,0:T(1,128)}', space=vmem, size = 0x9000, scoped, tag = 'internal scratch']
  %s0 = inlined_call_operand.vmem [shape: f32[2,1,4], index: 0, kind: input, shape index: {}]
  %s1 = inlined_call_operand.vmem [shape: f32[2,256,4], index: 1, kind: input, shape index: {}]
  %s2 = inlined_call_operand.vmem [shape: f32[4,64], index: 2, kind: input, shape index: {}]
  %s3 = inlined_call_operand.vmem [shape: f32[64,4], index: 3, kind: input, shape index: {}]
  %s4 = inlined_call_operand.vmem [shape: f32[2,256,4], index: 4, kind: output, shape index: {}]
  %s5 = sld [smem:[#allocation0]]
  $region49: #{gcea_block.3} parent=0
    _
  %s7 = ssub.s32 1, %s5
  %s8 = scalar_select 0, %s7, %s5
  loop: start=0, step=1, limit=6
  $region2: #{gcea_block.3} parent=0 // loop_pre_header
    _
  $region3: #{gcea_block.3} parent=0 // loop_header
    %s10 = sphi 0, %s14
    %p11 = scmp.ge.s32.totalorder %s10, 6
    %s17 = sphi 0, %s29
    %s18 = sphi 0, %s25
    %s19 = sphi 0, %s17
    %s20 = sphi 0, %s18
    %s21 = sphi 0, %s19
    %s22 = sphi 0, %s20
    %s32 = sphi 0, %s34
    %s35 = sphi 0, %s32
    %s36 = sphi 0, %s35
    %s52 = sphi 0, %s36
    %s60 = sphi 0, %s62
    %s63 = sphi 0, %s60
    %s64 = sphi 0, %s63
    %s80 = sphi 0, %s64
    %s84 = sphi 0, %s84
    %s86 = sphi 0, %s84
    %s87 = sphi 0, %s86
    %s101 = sphi 0, %s87
    %s105 = sphi 0, %s105
    %s107 = sphi 0, %s105
    %s108 = sphi 0, %s107
    %s122 = sphi 0, %s108
    %s130 = sphi 0, %s132
    %s133 = sphi 0, %s130
    %s134 = sphi 0, %s133
    %s150 = sphi 0, %s134
  $region4: #{gcea_block.3} parent=0 // loop_header_branch
    %13 = sbr.rel (%p11) target = $region8
  $region5: #{gcea_block.3} parent=0 // loop_body
    %s15 = ssub.s32 %s10, 1
    %s16 = ssub.s32 %s10, 2
    %s23 = sadd.s32 1, %s18
    %p24 = scmp.ge.s32.totalorder %s23, 2
    %s25 = scalar_select %p24, 0, %s23
    %s26 = sadd.s32 1, %s17
    %s27 = scalar_select %p24, %s26, %s17
    %p28 = scmp.ge.s32.totalorder %s27, 2
    %s29 = scalar_select %p28, 0, %s27
    %s30 = ssub.s32 %s17, %s29
    %p31 = scmp.eq.s32.totalorder %s30, 0
    %s33 = sadd.s32 %s32, 1
    %s34 = scalar_select %p31, %s32, %s33
    %p37 = pneg %p31
    %p38 = scmp.eq.s32.totalorder %s10, 3
    %p39 = por %p37, %p38
    %p40 = scmp.ne.s32.totalorder %s32, %s35
    %p41 = scmp.eq.s32.totalorder %s10, 0
    %p42 = por %p40, %p41
    %p43 = scmp.ne.s32.totalorder %s32, %s35
    %p44 = scmp.eq.s32.totalorder %s15, 3
    %p45 = por %p43, %p44
    %p46 = scmp.ne.s32.totalorder %s35, %s36
    %p47 = scmp.eq.s32.totalorder %s15, 0
    %p48 = por %p46, %p47
    %p49 = scmp.ne.s32.totalorder %s35, %s36
    %p50 = scmp.eq.s32.totalorder %s16, 3
    %p51 = por %p49, %p50
    %p53 = scmp.ne.s32.totalorder %s36, %s52
    %p54 = scmp.eq.s32.totalorder %s16, 0
    %p55 = por %p53, %p54
    %s56 = ssub.s32 %s17, %s29
    %s57 = ssub.s32 %s18, %s25
    %s58 = sor.u32 %s56, %s57
    %p59 = scmp.eq.s32.totalorder %s58, 0
    %s61 = sadd.s32 %s60, 1
    %s62 = scalar_select %p59, %s60, %s61
    %p65 = pneg %p59
    %p66 = scmp.eq.s32.totalorder %s10, 3
    %p67 = por %p65, %p66
    %p68 = scmp.ne.s32.totalorder %s60, %s63
    %p69 = scmp.eq.s32.totalorder %s10, 0
    %p70 = por %p68, %p69
    %p71 = scmp.ne.s32.totalorder %s60, %s63
    %p72 = scmp.eq.s32.totalorder %s15, 3
    %p73 = por %p71, %p72
    %p74 = scmp.ne.s32.totalorder %s63, %s64
    %p75 = scmp.eq.s32.totalorder %s15, 0
    %p76 = por %p74, %p75
    %p77 = scmp.ne.s32.totalorder %s63, %s64
    %p78 = scmp.eq.s32.totalorder %s16, 3
    %p79 = por %p77, %p78
    %p81 = scmp.ne.s32.totalorder %s64, %s80
    %p82 = scmp.eq.s32.totalorder %s16, 0
    %p83 = por %p81, %p82
    %s85 = sadd.s32 %s84, 1
    %p88 = scmp.eq.s32.totalorder %s10, 3
    %p89 = scmp.ne.s32.totalorder %s84, %s86
    %p90 = scmp.eq.s32.totalorder %s10, 0
    %p91 = por %p89, %p90
    %p92 = scmp.ne.s32.totalorder %s84, %s86
    %p93 = scmp.eq.s32.totalorder %s15, 3
    %p94 = por %p92, %p93
    %p95 = scmp.ne.s32.totalorder %s86, %s87
    %p96 = scmp.eq.s32.totalorder %s15, 0
    %p97 = por %p95, %p96
    %p98 = scmp.ne.s32.totalorder %s86, %s87
    %p99 = scmp.eq.s32.totalorder %s16, 3
    %p100 = por %p98, %p99
    %p102 = scmp.ne.s32.totalorder %s87, %s101
    %p103 = scmp.eq.s32.totalorder %s16, 0
    %p104 = por %p102, %p103
    %s106 = sadd.s32 %s105, 1
    %p109 = scmp.eq.s32.totalorder %s10, 3
    %p110 = scmp.ne.s32.totalorder %s105, %s107
    %p111 = scmp.eq.s32.totalorder %s10, 0
    %p112 = por %p110, %p111
    %p113 = scmp.ne.s32.totalorder %s105, %s107
    %p114 = scmp.eq.s32.totalorder %s15, 3
    %p115 = por %p113, %p114
    %p116 = scmp.ne.s32.totalorder %s107, %s108
    %p117 = scmp.eq.s32.totalorder %s15, 0
    %p118 = por %p116, %p117
    %p119 = scmp.ne.s32.totalorder %s107, %s108
    %p120 = scmp.eq.s32.totalorder %s16, 3
    %p121 = por %p119, %p120
    %p123 = scmp.ne.s32.totalorder %s108, %s122
    %p124 = scmp.eq.s32.totalorder %s16, 0
    %p125 = por %p123, %p124
    %s126 = ssub.s32 %s17, %s29
    %s127 = ssub.s32 %s18, %s25
    %s128 = sor.u32 %s126, %s127
    %p129 = scmp.eq.s32.totalorder %s128, 0
    %s131 = sadd.s32 %s130, 1
    %s132 = scalar_select %p129, %s130, %s131
    %p135 = pneg %p129
    %p136 = scmp.eq.s32.totalorder %s10, 3
    %p137 = por %p135, %p136
    %p138 = scmp.ne.s32.totalorder %s130, %s133
    %p139 = scmp.eq.s32.totalorder %s10, 0
    %p140 = por %p138, %p139
    %p141 = scmp.ne.s32.totalorder %s130, %s133
    %p142 = scmp.eq.s32.totalorder %s15, 3
    %p143 = por %p141, %p142
    %p144 = scmp.ne.s32.totalorder %s133, %s134
    %p145 = scmp.eq.s32.totalorder %s15, 0
    %p146 = por %p144, %p145
    %p147 = scmp.ne.s32.totalorder %s133, %s134
    %p148 = scmp.eq.s32.totalorder %s16, 3
    %p149 = por %p147, %p148
    %p151 = scmp.ne.s32.totalorder %s134, %s150
    %p152 = scmp.eq.s32.totalorder %s16, 0
    %p153 = por %p151, %p152
    %p154 = scmp.le.s32.totalorder 1, %s10
    %p155 = scmp.lt.s32.totalorder %s10, 5
    %p156 = pnand %p154, %p155
    %p157 = pneg %p156
    // Predicated region
    $region9: #{gcea_block.3} parent=5 // pred_check
      _
    $region10: #{gcea_block.3} parent=5 // pred_check_branch
      %159 = sbr.rel (%p156) target = $region12
    $region11: #{gcea_block.3} parent=5 // pred_region
      %s160 = ssub.s32 %s10, 1
      // Predicated region
      $region13: #{gcea_block.3} parent=11 // pred_check
        %p161 = pneg %p97
      $region14: #{gcea_block.3} parent=11 // pred_check_branch
        %163 = sbr.rel (%p161) target = $region16
      $region15: #{gcea_block.3} parent=11 // pred_region
        _
      $region16: #{gcea_block.3} parent=11 // pred_fallthru
        _
      // Predicated region
      $region17: #{gcea_block.3} parent=11 // pred_check
        %p164 = pneg %p118
      $region18: #{gcea_block.3} parent=11 // pred_check_branch
        %166 = sbr.rel (%p164) target = $region20
      $region19: #{gcea_block.3} parent=11 // pred_region
        _
      $region20: #{gcea_block.3} parent=11 // pred_fallthru
        _
    $region12: #{gcea_block.3} parent=5 // pred_fallthru
      _
    %p167 = scmp.lt.s32.totalorder %s10, 4
    // Predicated region
    $region21: #{gcea_block.3} parent=5 // pred_check
      %p168 = pneg %p167
    $region22: #{gcea_block.3} parent=5 // pred_check_branch
      %170 = sbr.rel (%p168) target = $region24
    $region23: #{gcea_block.3} parent=5 // pred_region
      // Predicated region
      $region25: #{gcea_block.3} parent=23 // pred_check
        %p171 = pneg %p42
      $region26: #{gcea_block.3} parent=23 // pred_check_branch
        %173 = sbr.rel (%p171) target = $region28
      $region27: #{gcea_block.3} parent=23 // pred_region
        %p174 = scmp.lt.s32.totalorder %s17, 1
        %s175 = scalar_select %p174, %s17, 1
        %s176 = scalar_lea.vmem %s0, %s175
      $region28: #{gcea_block.3} parent=23 // pred_fallthru
        _
      // Predicated region
      $region29: #{gcea_block.3} parent=23 // pred_check
        %p177 = pneg %p70
      $region30: #{gcea_block.3} parent=23 // pred_check_branch
        %179 = sbr.rel (%p177) target = $region32
      $region31: #{gcea_block.3} parent=23 // pred_region
        %s180 = smul.u32 16, %s18
        %p181 = scmp.lt.s32.totalorder %s17, 1
        %s182 = scalar_select %p181, %s17, 1
        %p183 = scmp.lt.s32.totalorder %s180, 31
        %s184 = scalar_select %p183, %s180, 31
        %s185 = smul.addr %s182, 32
        %s186 = sadd.s32 %s184, %s185
        %s187 = smul.addr %s186, 8
        %s188 = scalar_lea.vmem %s1, %s187
        %s189 = smul.u32 16, %s18
      $region32: #{gcea_block.3} parent=23 // pred_fallthru
        _
    $region24: #{gcea_block.3} parent=5 // pred_fallthru
      _
    %p190 = scmp.le.s32.totalorder 1, %s10
    %p191 = scmp.lt.s32.totalorder %s10, 5
    %p192 = pnand %p190, %p191
    %p193 = pneg %p192
    // Predicated region
    $region33: #{gcea_block.3} parent=5 // pred_check
      _
    $region34: #{gcea_block.3} parent=5 // pred_check_branch
      %195 = sbr.rel (%p192) target = $region36
    $region35: #{gcea_block.3} parent=5 // pred_region
      %s196 = ssub.s32 %s10, 1
      %p197 = scmp.lt.s32.totalorder %s19, 1
      %s198 = scalar_select %p197, %s19, 1
      %s199 = scalar_lea.vmem %s0, %s198
      %p200 = pneg %p48
      %p201 = pneg %p45
      %s202 = smul.u32 16, %s20
      %p203 = scmp.lt.s32.totalorder %s19, 1
      %s204 = scalar_select %p203, %s19, 1
      %p205 = scmp.lt.s32.totalorder %s202, 31
      %s206 = scalar_select %p205, %s202, 31
      %s207 = smul.addr %s204, 32
      %s208 = sadd.s32 %s206, %s207
      %s209 = smul.addr %s208, 8
      %s210 = scalar_lea.vmem %s1, %s209
      %p211 = pneg %p76
      %p212 = pneg %p73
      %p213 = pneg %p97
      %p214 = pneg %p94
      %p215 = pneg %p118
      %p216 = pneg %p115
      %p217 = pneg %p146
      %p218 = pneg %p143
      %s219 = smul.u32 16, %s20
      %p220 = scmp.lt.s32.totalorder %s19, 1
      %s221 = scalar_select %p220, %s19, 1
      %p222 = scmp.lt.s32.totalorder %s219, 31
      %s223 = scalar_select %p222, %s219, 31
      %s224 = smul.addr %s221, 32
      %s225 = sadd.s32 %s223, %s224
      %s226 = smul.addr %s225, 8
      %s227 = scalar_lea.vmem %s4, %s226
      %p228 = scmp.lt.s32.totalorder %s19, 1
      %s229 = scalar_select %p228, %s19, 1
      %s230 = scalar_lea.vmem %s0, %s229
      %s231 = smul.u32 16, %s20
      %p232 = scmp.lt.s32.totalorder %s19, 1
      %s233 = scalar_select %p232, %s19, 1
      %p234 = scmp.lt.s32.totalorder %s231, 31
      %s235 = scalar_select %p234, %s231, 31
      %s236 = smul.addr %s233, 32
      %s237 = sadd.s32 %s235, %s236
      %s238 = smul.addr %s237, 8
      %s239 = scalar_lea.vmem %s1, %s238
      %s240 = smul.u32 16, %s20
      %s241 = smul.u32 16, %s20
      %p242 = scmp.lt.s32.totalorder %s19, 1
      %s243 = scalar_select %p242, %s19, 1
      %p244 = scmp.lt.s32.totalorder %s241, 31
      %s245 = scalar_select %p244, %s241, 31
      %s246 = smul.addr %s243, 32
      %s247 = sadd.s32 %s245, %s246
      %s248 = smul.addr %s247, 8
      %s249 = scalar_lea.vmem %s4, %s248
      %s250 = smul.u32 16, %s20
      %v251 = vld [vmem:[%s239] sm:$0xff]
      %v252 = vld [vmem:[%s239 + $0x8] sm:$0xff]
      %v253 = vld [vmem:[%s239 + $0x10] sm:$0xff]
      %v254 = vld [vmem:[%s239 + $0x18] sm:$0xff]
      %v255 = vld [vmem:[%s239 + $0x20] sm:$0xff]
      %v256 = vld [vmem:[%s239 + $0x28] sm:$0xff]
      %v257 = vld [vmem:[%s239 + $0x30] sm:$0xff]
      %v258 = vld [vmem:[%s239 + $0x38] sm:$0xff]
      %v259 = vld [vmem:[%s239 + $0x40] sm:$0xff]
      %v260 = vld [vmem:[%s239 + $0x48] sm:$0xff]
      %v261 = vld [vmem:[%s239 + $0x50] sm:$0xff]
      %v262 = vld [vmem:[%s239 + $0x58] sm:$0xff]
      %v263 = vld [vmem:[%s239 + $0x60] sm:$0xff]
      %v264 = vld [vmem:[%s239 + $0x68] sm:$0xff]
      %v265 = vld [vmem:[%s239 + $0x70] sm:$0xff]
      %v266 = vld [vmem:[%s239 + $0x78] sm:$0xff]
      %v267 = vld [vmem:[%s230] sm:$0x1]
      %s268 = smul.u32 %s20, 128
      %v269 = vlaneseq
      %v270 = vshrl.u32 %v269, 7
      %v271 = vadd.s32 %v270, 8
      %v272 = vadd.s32 %v270, 16
      %v273 = vadd.s32 %v270, 24
      %v274 = vadd.s32 %v270, 32
      %v275 = vadd.s32 %v270, 40
      %v276 = vadd.s32 %v270, 48
      %v277 = vadd.s32 %v270, 56
      %v278 = vadd.s32 %v270, 64
      %v279 = vadd.s32 %v270, 72
      %v280 = vadd.s32 %v270, 80
      %v281 = vadd.s32 %v270, 88
      %v282 = vadd.s32 %v270, 96
      %v283 = vadd.s32 %v270, 104
      %v284 = vadd.s32 %v270, 112
      %v285 = vadd.s32 %v270, 120
      %v286 = vstv %s268
      %v287 = vadd.s32 %v270, %v286
      %v288 = vadd.s32 %v271, %v286
      %v289 = vadd.s32 %v272, %v286
      %v290 = vadd.s32 %v273, %v286
      %v291 = vadd.s32 %v274, %v286
      %v292 = vadd.s32 %v275, %v286
      %v293 = vadd.s32 %v276, %v286
      %v294 = vadd.s32 %v277, %v286
      %v295 = vadd.s32 %v278, %v286
      %v296 = vadd.s32 %v279, %v286
      %v297 = vadd.s32 %v280, %v286
      %v298 = vadd.s32 %v281, %v286
      %v299 = vadd.s32 %v282, %v286
      %v300 = vadd.s32 %v283, %v286
      %v301 = vadd.s32 %v284, %v286
      %v302 = vadd.s32 %v285, %v286
      %v303 = vlaneseq
      %v304 = vand.u32 %v303, 127
      %v305 = vmul.u32 %v287, 4
      %v306 = vmul.u32 %v288, 4
      %v307 = vmul.u32 %v289, 4
      %v308 = vmul.u32 %v290, 4
      %v309 = vmul.u32 %v291, 4
      %v310 = vmul.u32 %v292, 4
      %v311 = vmul.u32 %v293, 4
      %v312 = vmul.u32 %v294, 4
      %v313 = vmul.u32 %v295, 4
      %v314 = vmul.u32 %v296, 4
      %v315 = vmul.u32 %v297, 4
      %v316 = vmul.u32 %v298, 4
      %v317 = vmul.u32 %v299, 4
      %v318 = vmul.u32 %v300, 4
      %v319 = vmul.u32 %v301, 4
      %v320 = vmul.u32 %v302, 4
      %v321 = vadd.s32 %v305, %v304
      %v322 = vadd.s32 %v306, %v304
      %v323 = vadd.s32 %v307, %v304
      %v324 = vadd.s32 %v308, %v304
      %v325 = vadd.s32 %v309, %v304
      %v326 = vadd.s32 %v310, %v304
      %v327 = vadd.s32 %v311, %v304
      %v328 = vadd.s32 %v312, %v304
      %v329 = vadd.s32 %v313, %v304
      %v330 = vadd.s32 %v314, %v304
      %v331 = vadd.s32 %v315, %v304
      %v332 = vadd.s32 %v316, %v304
      %v333 = vadd.s32 %v317, %v304
      %v334 = vadd.s32 %v318, %v304
      %v335 = vadd.s32 %v319, %v304
      %v336 = vadd.s32 %v320, %v304
      %v338 = vperm.slane %v267, 0
      %339 = vset.pattern.permute.xlu0 0
      %340 = vperm.xlu0 %339, %v338
      %v341 = vpop.permute.xlu0 %340
      %v343 = vadd.f32 %v341, 0.0
      %vm344 = vcmp.ge.s32.totalorder %v321, 256
      %vm345 = vcmp.ge.s32.totalorder %v322, 256
      %vm346 = vcmp.ge.s32.totalorder %v323, 256
      %vm347 = vcmp.ge.s32.totalorder %v324, 256
      %vm348 = vcmp.ge.s32.totalorder %v325, 256
      %vm349 = vcmp.ge.s32.totalorder %v326, 256
      %vm350 = vcmp.ge.s32.totalorder %v327, 256
      %vm351 = vcmp.ge.s32.totalorder %v328, 256
      %vm352 = vcmp.ge.s32.totalorder %v329, 256
      %vm353 = vcmp.ge.s32.totalorder %v330, 256
      %vm354 = vcmp.ge.s32.totalorder %v331, 256
      %vm355 = vcmp.ge.s32.totalorder %v332, 256
      %vm356 = vcmp.ge.s32.totalorder %v333, 256
      %vm357 = vcmp.ge.s32.totalorder %v334, 256
      %vm358 = vcmp.ge.s32.totalorder %v335, 256
      %vm359 = vcmp.ge.s32.totalorder %v336, 256
      %360 = vset.pattern.permute.xlu0 1
      %361 = vperm.xlu0 %360, %v338
      %v362 = vpop.permute.xlu0 %361
      %v364 = vsel %vm344, %v362, %v343
      %v365 = vsel %vm345, %v362, %v343
      %v366 = vsel %vm346, %v362, %v343
      %v367 = vsel %vm347, %v362, %v343
      %v368 = vsel %vm348, %v362, %v343
      %v369 = vsel %vm349, %v362, %v343
      %v370 = vsel %vm350, %v362, %v343
      %v371 = vsel %vm351, %v362, %v343
      %v372 = vsel %vm352, %v362, %v343
      %v373 = vsel %vm353, %v362, %v343
      %v374 = vsel %vm354, %v362, %v343
      %v375 = vsel %vm355, %v362, %v343
      %v376 = vsel %vm356, %v362, %v343
      %v377 = vsel %vm357, %v362, %v343
      %v378 = vsel %vm358, %v362, %v343
      %v379 = vsel %vm359, %v362, %v343
      %vm380 = vcmp.ge.s32.totalorder %v321, 512
      %vm381 = vcmp.ge.s32.totalorder %v322, 512
      %vm382 = vcmp.ge.s32.totalorder %v323, 512
      %vm383 = vcmp.ge.s32.totalorder %v324, 512
      %vm384 = vcmp.ge.s32.totalorder %v325, 512
      %vm385 = vcmp.ge.s32.totalorder %v326, 512
      %vm386 = vcmp.ge.s32.totalorder %v327, 512
      %vm387 = vcmp.ge.s32.totalorder %v328, 512
      %vm388 = vcmp.ge.s32.totalorder %v329, 512
      %vm389 = vcmp.ge.s32.totalorder %v330, 512
      %vm390 = vcmp.ge.s32.totalorder %v331, 512
      %vm391 = vcmp.ge.s32.totalorder %v332, 512
      %vm392 = vcmp.ge.s32.totalorder %v333, 512
      %vm393 = vcmp.ge.s32.totalorder %v334, 512
      %vm394 = vcmp.ge.s32.totalorder %v335, 512
      %vm395 = vcmp.ge.s32.totalorder %v336, 512
      %396 = vset.pattern.permute.xlu0 2
      %397 = vperm.xlu0 %396, %v338
      %v398 = vpop.permute.xlu0 %397
      %v400 = vsel %vm380, %v398, %v364
      %v401 = vsel %vm381, %v398, %v365
      %v402 = vsel %vm382, %v398, %v366
      %v403 = vsel %vm383, %v398, %v367
      %v404 = vsel %vm384, %v398, %v368
      %v405 = vsel %vm385, %v398, %v369
      %v406 = vsel %vm386, %v398, %v370
      %v407 = vsel %vm387, %v398, %v371
      %v408 = vsel %vm388, %v398, %v372
      %v409 = vsel %vm389, %v398, %v373
      %v410 = vsel %vm390, %v398, %v374
      %v411 = vsel %vm391, %v398, %v375
      %v412 = vsel %vm392, %v398, %v376
      %v413 = vsel %vm393, %v398, %v377
      %v414 = vsel %vm394, %v398, %v378
      %v415 = vsel %vm395, %v398, %v379
      %vm416 = vcmp.ge.s32.totalorder %v321, 768
      %vm417 = vcmp.ge.s32.totalorder %v322, 768
      %vm418 = vcmp.ge.s32.totalorder %v323, 768
      %vm419 = vcmp.ge.s32.totalorder %v324, 768
      %vm420 = vcmp.ge.s32.totalorder %v325, 768
      %vm421 = vcmp.ge.s32.totalorder %v326, 768
      %vm422 = vcmp.ge.s32.totalorder %v327, 768
      %vm423 = vcmp.ge.s32.totalorder %v328, 768
      %vm424 = vcmp.ge.s32.totalorder %v329, 768
      %vm425 = vcmp.ge.s32.totalorder %v330, 768
      %vm426 = vcmp.ge.s32.totalorder %v331, 768
      %vm427 = vcmp.ge.s32.totalorder %v332, 768
      %vm428 = vcmp.ge.s32.totalorder %v333, 768
      %vm429 = vcmp.ge.s32.totalorder %v334, 768
      %vm430 = vcmp.ge.s32.totalorder %v335, 768
      %vm431 = vcmp.ge.s32.totalorder %v336, 768
      %432 = vset.pattern.permute.xlu0 3
      %433 = vperm.xlu0 %432, %v338
      %v434 = vpop.permute.xlu0 %433
      %v436 = vsel %vm416, %v434, %v400
      %v437 = vsel %vm417, %v434, %v401
      %v438 = vsel %vm418, %v434, %v402
      %v439 = vsel %vm419, %v434, %v403
      %v440 = vsel %vm420, %v434, %v404
      %v441 = vsel %vm421, %v434, %v405
      %v442 = vsel %vm422, %v434, %v406
      %v443 = vsel %vm423, %v434, %v407
      %v444 = vsel %vm424, %v434, %v408
      %v445 = vsel %vm425, %v434, %v409
      %v446 = vsel %vm426, %v434, %v410
      %v447 = vsel %vm427, %v434, %v411
      %v448 = vsel %vm428, %v434, %v412
      %v449 = vsel %vm429, %v434, %v413
      %v450 = vsel %vm430, %v434, %v414
      %v451 = vsel %vm431, %v434, %v415
      %v452 = vadd.f32 %v251, %v436
      %v453 = vadd.f32 %v252, %v437
      %v454 = vadd.f32 %v253, %v438
      %v455 = vadd.f32 %v254, %v439
      %v456 = vadd.f32 %v255, %v440
      %v457 = vadd.f32 %v256, %v441
      %v458 = vadd.f32 %v257, %v442
      %v459 = vadd.f32 %v258, %v443
      %v460 = vadd.f32 %v259, %v444
      %v461 = vadd.f32 %v260, %v445
      %v462 = vadd.f32 %v261, %v446
      %v463 = vadd.f32 %v262, %v447
      %v464 = vadd.f32 %v263, %v448
      %v465 = vadd.f32 %v264, %v449
      %v466 = vadd.f32 %v265, %v450
      %v467 = vadd.f32 %v266, %v451
      %v468 = vld [vmem:[%s2] sm:$0xf]
      %470 = vset.pattern.permute.xlu0 0
      %471 = vperm.xlu0 %470, %v452
      %v472 = vpop.permute.xlu0 %471
      %475 = vset.pattern.permute.xlu0 0
      %476 = vperm.xlu0 %475, %v453
      %v477 = vpop.permute.xlu0 %476
      %480 = vset.pattern.permute.xlu0 0
      %481 = vperm.xlu0 %480, %v454
      %v482 = vpop.permute.xlu0 %481
      %485 = vset.pattern.permute.xlu0 0
      %486 = vperm.xlu0 %485, %v455
      %v487 = vpop.permute.xlu0 %486
      %490 = vset.pattern.permute.xlu0 0
      %491 = vperm.xlu0 %490, %v456
      %v492 = vpop.permute.xlu0 %491
      %495 = vset.pattern.permute.xlu0 0
      %496 = vperm.xlu0 %495, %v457
      %v497 = vpop.permute.xlu0 %496
      %500 = vset.pattern.permute.xlu0 0
      %501 = vperm.xlu0 %500, %v458
      %v502 = vpop.permute.xlu0 %501
      %505 = vset.pattern.permute.xlu0 0
      %506 = vperm.xlu0 %505, %v459
      %v507 = vpop.permute.xlu0 %506
      %510 = vset.pattern.permute.xlu0 0
      %511 = vperm.xlu0 %510, %v460
      %v512 = vpop.permute.xlu0 %511
      %515 = vset.pattern.permute.xlu0 0
      %516 = vperm.xlu0 %515, %v461
      %v517 = vpop.permute.xlu0 %516
      %520 = vset.pattern.permute.xlu0 0
      %521 = vperm.xlu0 %520, %v462
      %v522 = vpop.permute.xlu0 %521
      %525 = vset.pattern.permute.xlu0 0
      %526 = vperm.xlu0 %525, %v463
      %v527 = vpop.permute.xlu0 %526
      %530 = vset.pattern.permute.xlu0 0
      %531 = vperm.xlu0 %530, %v464
      %v532 = vpop.permute.xlu0 %531
      %535 = vset.pattern.permute.xlu0 0
      %536 = vperm.xlu0 %535, %v465
      %v537 = vpop.permute.xlu0 %536
      %540 = vset.pattern.permute.xlu0 0
      %541 = vperm.xlu0 %540, %v466
      %v542 = vpop.permute.xlu0 %541
      %545 = vset.pattern.permute.xlu0 0
      %546 = vperm.xlu0 %545, %v467
      %v547 = vpop.permute.xlu0 %546
      %v549 = vperm.slane %v468, 0
      %v550 = vmul.f32 %v472, %v549
      %v551 = vmul.f32 %v477, %v549
      %v552 = vmul.f32 %v482, %v549
      %v553 = vmul.f32 %v487, %v549
      %v554 = vmul.f32 %v492, %v549
      %v555 = vmul.f32 %v497, %v549
      %v556 = vmul.f32 %v502, %v549
      %v557 = vmul.f32 %v507, %v549
      %v558 = vmul.f32 %v512, %v549
      %v559 = vmul.f32 %v517, %v549
      %v560 = vmul.f32 %v522, %v549
      %v561 = vmul.f32 %v527, %v549
      %v562 = vmul.f32 %v532, %v549
      %v563 = vmul.f32 %v537, %v549
      %v564 = vmul.f32 %v542, %v549
      %v565 = vmul.f32 %v547, %v549
      %566 = vset.pattern.permute.xlu0 1
      %567 = vperm.xlu0 %566, %v452
      %v568 = vpop.permute.xlu0 %567
      %570 = vset.pattern.permute.xlu0 1
      %571 = vperm.xlu0 %570, %v453
      %v572 = vpop.permute.xlu0 %571
      %574 = vset.pattern.permute.xlu0 1
      %575 = vperm.xlu0 %574, %v454
      %v576 = vpop.permute.xlu0 %575
      %578 = vset.pattern.permute.xlu0 1
      %579 = vperm.xlu0 %578, %v455
      %v580 = vpop.permute.xlu0 %579
      %582 = vset.pattern.permute.xlu0 1
      %583 = vperm.xlu0 %582, %v456
      %v584 = vpop.permute.xlu0 %583
      %586 = vset.pattern.permute.xlu0 1
      %587 = vperm.xlu0 %586, %v457
      %v588 = vpop.permute.xlu0 %587
      %590 = vset.pattern.permute.xlu0 1
      %591 = vperm.xlu0 %590, %v458
      %v592 = vpop.permute.xlu0 %591
      %594 = vset.pattern.permute.xlu0 1
      %595 = vperm.xlu0 %594, %v459
      %v596 = vpop.permute.xlu0 %595
      %598 = vset.pattern.permute.xlu0 1
      %599 = vperm.xlu0 %598, %v460
      %v600 = vpop.permute.xlu0 %599
      %602 = vset.pattern.permute.xlu0 1
      %603 = vperm.xlu0 %602, %v461
      %v604 = vpop.permute.xlu0 %603
      %606 = vset.pattern.permute.xlu0 1
      %607 = vperm.xlu0 %606, %v462
      %v608 = vpop.permute.xlu0 %607
      %610 = vset.pattern.permute.xlu0 1
      %611 = vperm.xlu0 %610, %v463
      %v612 = vpop.permute.xlu0 %611
      %614 = vset.pattern.permute.xlu0 1
      %615 = vperm.xlu0 %614, %v464
      %v616 = vpop.permute.xlu0 %615
      %618 = vset.pattern.permute.xlu0 1
      %619 = vperm.xlu0 %618, %v465
      %v620 = vpop.permute.xlu0 %619
      %622 = vset.pattern.permute.xlu0 1
      %623 = vperm.xlu0 %622, %v466
      %v624 = vpop.permute.xlu0 %623
      %626 = vset.pattern.permute.xlu0 1
      %627 = vperm.xlu0 %626, %v467
      %v628 = vpop.permute.xlu0 %627
      %v630 = vperm.slane %v468, 1
      %v631 = vmul.f32 %v568, %v630
      %v632 = vmul.f32 %v572, %v630
      %v633 = vmul.f32 %v576, %v630
      %v634 = vmul.f32 %v580, %v630
      %v635 = vmul.f32 %v584, %v630
      %v636 = vmul.f32 %v588, %v630
      %v637 = vmul.f32 %v592, %v630
      %v638 = vmul.f32 %v596, %v630
      %v639 = vmul.f32 %v600, %v630
      %v640 = vmul.f32 %v604, %v630
      %v641 = vmul.f32 %v608, %v630
      %v642 = vmul.f32 %v612, %v630
      %v643 = vmul.f32 %v616, %v630
      %v644 = vmul.f32 %v620, %v630
      %v645 = vmul.f32 %v624, %v630
      %v646 = vmul.f32 %v628, %v630
      %v647 = vadd.f32 %v550, %v631
      %v648 = vadd.f32 %v551, %v632
      %v649 = vadd.f32 %v552, %v633
      %v650 = vadd.f32 %v553, %v634
      %v651 = vadd.f32 %v554, %v635
      %v652 = vadd.f32 %v555, %v636
      %v653 = vadd.f32 %v556, %v637
      %v654 = vadd.f32 %v557, %v638
      %v655 = vadd.f32 %v558, %v639
      %v656 = vadd.f32 %v559, %v640
      %v657 = vadd.f32 %v560, %v641
      %v658 = vadd.f32 %v561, %v642
      %v659 = vadd.f32 %v562, %v643
      %v660 = vadd.f32 %v563, %v644
      %v661 = vadd.f32 %v564, %v645
      %v662 = vadd.f32 %v565, %v646
      %663 = vset.pattern.permute.xlu0 2
      %664 = vperm.xlu0 %663, %v452
      %v665 = vpop.permute.xlu0 %664
      %667 = vset.pattern.permute.xlu0 2
      %668 = vperm.xlu0 %667, %v453
      %v669 = vpop.permute.xlu0 %668
      %671 = vset.pattern.permute.xlu0 2
      %672 = vperm.xlu0 %671, %v454
      %v673 = vpop.permute.xlu0 %672
      %675 = vset.pattern.permute.xlu0 2
      %676 = vperm.xlu0 %675, %v455
      %v677 = vpop.permute.xlu0 %676
      %679 = vset.pattern.permute.xlu0 2
      %680 = vperm.xlu0 %679, %v456
      %v681 = vpop.permute.xlu0 %680
      %683 = vset.pattern.permute.xlu0 2
      %684 = vperm.xlu0 %683, %v457
      %v685 = vpop.permute.xlu0 %684
      %687 = vset.pattern.permute.xlu0 2
      %688 = vperm.xlu0 %687, %v458
      %v689 = vpop.permute.xlu0 %688
      %691 = vset.pattern.permute.xlu0 2
      %692 = vperm.xlu0 %691, %v459
      %v693 = vpop.permute.xlu0 %692
      %695 = vset.pattern.permute.xlu0 2
      %696 = vperm.xlu0 %695, %v460
      %v697 = vpop.permute.xlu0 %696
      %699 = vset.pattern.permute.xlu0 2
      %700 = vperm.xlu0 %699, %v461
      %v701 = vpop.permute.xlu0 %700
      %703 = vset.pattern.permute.xlu0 2
      %704 = vperm.xlu0 %703, %v462
      %v705 = vpop.permute.xlu0 %704
      %707 = vset.pattern.permute.xlu0 2
      %708 = vperm.xlu0 %707, %v463
      %v709 = vpop.permute.xlu0 %708
      %711 = vset.pattern.permute.xlu0 2
      %712 = vperm.xlu0 %711, %v464
      %v713 = vpop.permute.xlu0 %712
      %715 = vset.pattern.permute.xlu0 2
      %716 = vperm.xlu0 %715, %v465
      %v717 = vpop.permute.xlu0 %716
      %719 = vset.pattern.permute.xlu0 2
      %720 = vperm.xlu0 %719, %v466
      %v721 = vpop.permute.xlu0 %720
      %723 = vset.pattern.permute.xlu0 2
      %724 = vperm.xlu0 %723, %v467
      %v725 = vpop.permute.xlu0 %724
      %v727 = vperm.slane %v468, 2
      %v728 = vmul.f32 %v665, %v727
      %v729 = vmul.f32 %v669, %v727
      %v730 = vmul.f32 %v673, %v727
      %v731 = vmul.f32 %v677, %v727
      %v732 = vmul.f32 %v681, %v727
      %v733 = vmul.f32 %v685, %v727
      %v734 = vmul.f32 %v689, %v727
      %v735 = vmul.f32 %v693, %v727
      %v736 = vmul.f32 %v697, %v727
      %v737 = vmul.f32 %v701, %v727
      %v738 = vmul.f32 %v705, %v727
      %v739 = vmul.f32 %v709, %v727
      %v740 = vmul.f32 %v713, %v727
      %v741 = vmul.f32 %v717, %v727
      %v742 = vmul.f32 %v721, %v727
      %v743 = vmul.f32 %v725, %v727
      %v744 = vadd.f32 %v647, %v728
      %v745 = vadd.f32 %v648, %v729
      %v746 = vadd.f32 %v649, %v730
      %v747 = vadd.f32 %v650, %v731
      %v748 = vadd.f32 %v651, %v732
      %v749 = vadd.f32 %v652, %v733
      %v750 = vadd.f32 %v653, %v734
      %v751 = vadd.f32 %v654, %v735
      %v752 = vadd.f32 %v655, %v736
      %v753 = vadd.f32 %v656, %v737
      %v754 = vadd.f32 %v657, %v738
      %v755 = vadd.f32 %v658, %v739
      %v756 = vadd.f32 %v659, %v740
      %v757 = vadd.f32 %v660, %v741
      %v758 = vadd.f32 %v661, %v742
      %v759 = vadd.f32 %v662, %v743
      %760 = vset.pattern.permute.xlu0 3
      %761 = vperm.xlu0 %760, %v452
      %v762 = vpop.permute.xlu0 %761
      %764 = vset.pattern.permute.xlu0 3
      %765 = vperm.xlu0 %764, %v453
      %v766 = vpop.permute.xlu0 %765
      %768 = vset.pattern.permute.xlu0 3
      %769 = vperm.xlu0 %768, %v454
      %v770 = vpop.permute.xlu0 %769
      %772 = vset.pattern.permute.xlu0 3
      %773 = vperm.xlu0 %772, %v455
      %v774 = vpop.permute.xlu0 %773
      %776 = vset.pattern.permute.xlu0 3
      %777 = vperm.xlu0 %776, %v456
      %v778 = vpop.permute.xlu0 %777
      %780 = vset.pattern.permute.xlu0 3
      %781 = vperm.xlu0 %780, %v457
      %v782 = vpop.permute.xlu0 %781
      %784 = vset.pattern.permute.xlu0 3
      %785 = vperm.xlu0 %784, %v458
      %v786 = vpop.permute.xlu0 %785
      %788 = vset.pattern.permute.xlu0 3
      %789 = vperm.xlu0 %788, %v459
      %v790 = vpop.permute.xlu0 %789
      %792 = vset.pattern.permute.xlu0 3
      %793 = vperm.xlu0 %792, %v460
      %v794 = vpop.permute.xlu0 %793
      %796 = vset.pattern.permute.xlu0 3
      %797 = vperm.xlu0 %796, %v461
      %v798 = vpop.permute.xlu0 %797
      %800 = vset.pattern.permute.xlu0 3
      %801 = vperm.xlu0 %800, %v462
      %v802 = vpop.permute.xlu0 %801
      %804 = vset.pattern.permute.xlu0 3
      %805 = vperm.xlu0 %804, %v463
      %v806 = vpop.permute.xlu0 %805
      %808 = vset.pattern.permute.xlu0 3
      %809 = vperm.xlu0 %808, %v464
      %v810 = vpop.permute.xlu0 %809
      %812 = vset.pattern.permute.xlu0 3
      %813 = vperm.xlu0 %812, %v465
      %v814 = vpop.permute.xlu0 %813
      %816 = vset.pattern.permute.xlu0 3
      %817 = vperm.xlu0 %816, %v466
      %v818 = vpop.permute.xlu0 %817
      %820 = vset.pattern.permute.xlu0 3
      %821 = vperm.xlu0 %820, %v467
      %v822 = vpop.permute.xlu0 %821
      %v824 = vperm.slane %v468, 3
      %v825 = vmul.f32 %v762, %v824
      %v826 = vmul.f32 %v766, %v824
      %v827 = vmul.f32 %v770, %v824
      %v828 = vmul.f32 %v774, %v824
      %v829 = vmul.f32 %v778, %v824
      %v830 = vmul.f32 %v782, %v824
      %v831 = vmul.f32 %v786, %v824
      %v832 = vmul.f32 %v790, %v824
      %v833 = vmul.f32 %v794, %v824
      %v834 = vmul.f32 %v798, %v824
      %v835 = vmul.f32 %v802, %v824
      %v836 = vmul.f32 %v806, %v824
      %v837 = vmul.f32 %v810, %v824
      %v838 = vmul.f32 %v814, %v824
      %v839 = vmul.f32 %v818, %v824
      %v840 = vmul.f32 %v822, %v824
      %v841 = vadd.f32 %v744, %v825
      %v842 = vadd.f32 %v745, %v826
      %v843 = vadd.f32 %v746, %v827
      %v844 = vadd.f32 %v747, %v828
      %v845 = vadd.f32 %v748, %v829
      %v846 = vadd.f32 %v749, %v830
      %v847 = vadd.f32 %v750, %v831
      %v848 = vadd.f32 %v751, %v832
      %v849 = vadd.f32 %v752, %v833
      %v850 = vadd.f32 %v753, %v834
      %v851 = vadd.f32 %v754, %v835
      %v852 = vadd.f32 %v755, %v836
      %v853 = vadd.f32 %v756, %v837
      %v854 = vadd.f32 %v757, %v838
      %v855 = vadd.f32 %v758, %v839
      %v856 = vadd.f32 %v759, %v840
      %vm857 = vcmask 523264
      %v858 = vsel %vm857, %v841, -inf
      %859 = vmax.xlane.f32.xlu0 %v858
      %v860 = vpop.xlane.xlu0 %859
      %v861 = vsel %vm857, %v842, -inf
      %862 = vmax.xlane.f32.xlu0 %v861
      %v863 = vpop.xlane.xlu0 %862
      %v864 = vsel %vm857, %v843, -inf
      %865 = vmax.xlane.f32.xlu0 %v864
      %v866 = vpop.xlane.xlu0 %865
      %v867 = vsel %vm857, %v844, -inf
      %868 = vmax.xlane.f32.xlu0 %v867
      %v869 = vpop.xlane.xlu0 %868
      %v870 = vsel %vm857, %v845, -inf
      %871 = vmax.xlane.f32.xlu0 %v870
      %v872 = vpop.xlane.xlu0 %871
      %v873 = vsel %vm857, %v846, -inf
      %874 = vmax.xlane.f32.xlu0 %v873
      %v875 = vpop.xlane.xlu0 %874
      %v876 = vsel %vm857, %v847, -inf
      %877 = vmax.xlane.f32.xlu0 %v876
      %v878 = vpop.xlane.xlu0 %877
      %v879 = vsel %vm857, %v848, -inf
      %880 = vmax.xlane.f32.xlu0 %v879
      %v881 = vpop.xlane.xlu0 %880
      %v882 = vsel %vm857, %v849, -inf
      %883 = vmax.xlane.f32.xlu0 %v882
      %v884 = vpop.xlane.xlu0 %883
      %v885 = vsel %vm857, %v850, -inf
      %886 = vmax.xlane.f32.xlu0 %v885
      %v887 = vpop.xlane.xlu0 %886
      %v888 = vsel %vm857, %v851, -inf
      %889 = vmax.xlane.f32.xlu0 %v888
      %v890 = vpop.xlane.xlu0 %889
      %v891 = vsel %vm857, %v852, -inf
      %892 = vmax.xlane.f32.xlu0 %v891
      %v893 = vpop.xlane.xlu0 %892
      %v894 = vsel %vm857, %v853, -inf
      %895 = vmax.xlane.f32.xlu0 %v894
      %v896 = vpop.xlane.xlu0 %895
      %v897 = vsel %vm857, %v854, -inf
      %898 = vmax.xlane.f32.xlu0 %v897
      %v899 = vpop.xlane.xlu0 %898
      %v900 = vsel %vm857, %v855, -inf
      %901 = vmax.xlane.f32.xlu0 %v900
      %v902 = vpop.xlane.xlu0 %901
      %v903 = vsel %vm857, %v856, -inf
      %904 = vmax.xlane.f32.xlu0 %v903
      %v905 = vpop.xlane.xlu0 %904
      %v906 = vsub.f32 %v841, %v860
      %v907 = vsub.f32 %v842, %v863
      %v908 = vsub.f32 %v843, %v866
      %v909 = vsub.f32 %v844, %v869
      %v910 = vsub.f32 %v845, %v872
      %v911 = vsub.f32 %v846, %v875
      %v912 = vsub.f32 %v847, %v878
      %v913 = vsub.f32 %v848, %v881
      %v914 = vsub.f32 %v849, %v884
      %v915 = vsub.f32 %v850, %v887
      %v916 = vsub.f32 %v851, %v890
      %v917 = vsub.f32 %v852, %v893
      %v918 = vsub.f32 %v853, %v896
      %v919 = vsub.f32 %v854, %v899
      %v920 = vsub.f32 %v855, %v902
      %v921 = vsub.f32 %v856, %v905
      %v922 = vmul.f32 %v906, 1.442695
      %v923 = vpow.pop %v922
      %v924 = vmul.f32 %v907, 1.442695
      %v925 = vpow.pop %v924
      %v926 = vmul.f32 %v908, 1.442695
      %v927 = vpow.pop %v926
      %v928 = vmul.f32 %v909, 1.442695
      %v929 = vpow.pop %v928
      %v930 = vmul.f32 %v910, 1.442695
      %v931 = vpow.pop %v930
      %v932 = vmul.f32 %v911, 1.442695
      %v933 = vpow.pop %v932
      %v934 = vmul.f32 %v912, 1.442695
      %v935 = vpow.pop %v934
      %v936 = vmul.f32 %v913, 1.442695
      %v937 = vpow.pop %v936
      %v938 = vmul.f32 %v914, 1.442695
      %v939 = vpow.pop %v938
      %v940 = vmul.f32 %v915, 1.442695
      %v941 = vpow.pop %v940
      %v942 = vmul.f32 %v916, 1.442695
      %v943 = vpow.pop %v942
      %v944 = vmul.f32 %v917, 1.442695
      %v945 = vpow.pop %v944
      %v946 = vmul.f32 %v918, 1.442695
      %v947 = vpow.pop %v946
      %v948 = vmul.f32 %v919, 1.442695
      %v949 = vpow.pop %v948
      %v950 = vmul.f32 %v920, 1.442695
      %v951 = vpow.pop %v950
      %v952 = vmul.f32 %v921, 1.442695
      %v953 = vpow.pop %v952
      %v954 = vsel %vm857, %v923, 0.0
      %955 = vadd.xlane.f32.xlu0 %v954
      %v956 = vpop.xlane.xlu0 %955
      %v957 = vsel %vm857, %v925, 0.0
      %958 = vadd.xlane.f32.xlu0 %v957
      %v959 = vpop.xlane.xlu0 %958
      %v960 = vsel %vm857, %v927, 0.0
      %961 = vadd.xlane.f32.xlu0 %v960
      %v962 = vpop.xlane.xlu0 %961
      %v963 = vsel %vm857, %v929, 0.0
      %964 = vadd.xlane.f32.xlu0 %v963
      %v965 = vpop.xlane.xlu0 %964
      %v966 = vsel %vm857, %v931, 0.0
      %967 = vadd.xlane.f32.xlu0 %v966
      %v968 = vpop.xlane.xlu0 %967
      %v969 = vsel %vm857, %v933, 0.0
      %970 = vadd.xlane.f32.xlu0 %v969
      %v971 = vpop.xlane.xlu0 %970
      %v972 = vsel %vm857, %v935, 0.0
      %973 = vadd.xlane.f32.xlu0 %v972
      %v974 = vpop.xlane.xlu0 %973
      %v975 = vsel %vm857, %v937, 0.0
      %976 = vadd.xlane.f32.xlu0 %v975
      %v977 = vpop.xlane.xlu0 %976
      %v978 = vsel %vm857, %v939, 0.0
      %979 = vadd.xlane.f32.xlu0 %v978
      %v980 = vpop.xlane.xlu0 %979
      %v981 = vsel %vm857, %v941, 0.0
      %982 = vadd.xlane.f32.xlu0 %v981
      %v983 = vpop.xlane.xlu0 %982
      %v984 = vsel %vm857, %v943, 0.0
      %985 = vadd.xlane.f32.xlu0 %v984
      %v986 = vpop.xlane.xlu0 %985
      %v987 = vsel %vm857, %v945, 0.0
      %988 = vadd.xlane.f32.xlu0 %v987
      %v989 = vpop.xlane.xlu0 %988
      %v990 = vsel %vm857, %v947, 0.0
      %991 = vadd.xlane.f32.xlu0 %v990
      %v992 = vpop.xlane.xlu0 %991
      %v993 = vsel %vm857, %v949, 0.0
      %994 = vadd.xlane.f32.xlu0 %v993
      %v995 = vpop.xlane.xlu0 %994
      %v996 = vsel %vm857, %v951, 0.0
      %997 = vadd.xlane.f32.xlu0 %v996
      %v998 = vpop.xlane.xlu0 %997
      %v999 = vsel %vm857, %v953, 0.0
      %1000 = vadd.xlane.f32.xlu0 %v999
      %v1001 = vpop.xlane.xlu0 %1000
      %v1002 = vrcp.pop %v956
      %v1003 = vmul.f32 %v956, %v1002
      %v1004 = vsub.f32 1.0, %v1003
      %v1005 = vmul.f32 %v1002, %v1004
      %v1006 = vadd.f32 %v1002, %v1005
      %vm1007 = vweird.f32 %v956
      %vm1008 = vweird.f32 %v1002
      %vm1009 = vmor %vm1007, %vm1008
      %v1010 = vsel %vm1009, %v1002, %v1006
      %v1011 = vand.u32 2147483647, %v956
      %vm1012 = vcmp.eq.f32.partialorder %v1011, 8.507059e+37
      %v1013 = vand.u32 %v956, 2147483648
      %v1014 = vor.u32 1.1754944e-38, %v1013
      %v1015 = vsel %vm1012, %v1014, %v1010
      %v1016 = vmul.f32 1.0, %v1015
      %v1017 = vrcp.pop %v959
      %v1018 = vmul.f32 %v959, %v1017
      %v1019 = vsub.f32 1.0, %v1018
      %v1020 = vmul.f32 %v1017, %v1019
      %v1021 = vadd.f32 %v1017, %v1020
      %vm1022 = vweird.f32 %v959
      %vm1023 = vweird.f32 %v1017
      %vm1024 = vmor %vm1022, %vm1023
      %v1025 = vsel %vm1024, %v1017, %v1021
      %v1026 = vand.u32 2147483647, %v959
      %vm1027 = vcmp.eq.f32.partialorder %v1026, 8.507059e+37
      %v1028 = vand.u32 %v959, 2147483648
      %v1029 = vor.u32 1.1754944e-38, %v1028
      %v1030 = vsel %vm1027, %v1029, %v1025
      %v1031 = vmul.f32 1.0, %v1030
      %v1032 = vrcp.pop %v962
      %v1033 = vmul.f32 %v962, %v1032
      %v1034 = vsub.f32 1.0, %v1033
      %v1035 = vmul.f32 %v1032, %v1034
      %v1036 = vadd.f32 %v1032, %v1035
      %vm1037 = vweird.f32 %v962
      %vm1038 = vweird.f32 %v1032
      %vm1039 = vmor %vm1037, %vm1038
      %v1040 = vsel %vm1039, %v1032, %v1036
      %v1041 = vand.u32 2147483647, %v962
      %vm1042 = vcmp.eq.f32.partialorder %v1041, 8.507059e+37
      %v1043 = vand.u32 %v962, 2147483648
      %v1044 = vor.u32 1.1754944e-38, %v1043
      %v1045 = vsel %vm1042, %v1044, %v1040
      %v1046 = vmul.f32 1.0, %v1045
      %v1047 = vrcp.pop %v965
      %v1048 = vmul.f32 %v965, %v1047
      %v1049 = vsub.f32 1.0, %v1048
      %v1050 = vmul.f32 %v1047, %v1049
      %v1051 = vadd.f32 %v1047, %v1050
      %vm1052 = vweird.f32 %v965
      %vm1053 = vweird.f32 %v1047
      %vm1054 = vmor %vm1052, %vm1053
      %v1055 = vsel %vm1054, %v1047, %v1051
      %v1056 = vand.u32 2147483647, %v965
      %vm1057 = vcmp.eq.f32.partialorder %v1056, 8.507059e+37
      %v1058 = vand.u32 %v965, 2147483648
      %v1059 = vor.u32 1.1754944e-38, %v1058
      %v1060 = vsel %vm1057, %v1059, %v1055
      %v1061 = vmul.f32 1.0, %v1060
      %v1062 = vrcp.pop %v968
      %v1063 = vmul.f32 %v968, %v1062
      %v1064 = vsub.f32 1.0, %v1063
      %v1065 = vmul.f32 %v1062, %v1064
      %v1066 = vadd.f32 %v1062, %v1065
      %vm1067 = vweird.f32 %v968
      %vm1068 = vweird.f32 %v1062
      %vm1069 = vmor %vm1067, %vm1068
      %v1070 = vsel %vm1069, %v1062, %v1066
      %v1071 = vand.u32 2147483647, %v968
      %vm1072 = vcmp.eq.f32.partialorder %v1071, 8.507059e+37
      %v1073 = vand.u32 %v968, 2147483648
      %v1074 = vor.u32 1.1754944e-38, %v1073
      %v1075 = vsel %vm1072, %v1074, %v1070
      %v1076 = vmul.f32 1.0, %v1075
      %v1077 = vrcp.pop %v971
      %v1078 = vmul.f32 %v971, %v1077
      %v1079 = vsub.f32 1.0, %v1078
      %v1080 = vmul.f32 %v1077, %v1079
      %v1081 = vadd.f32 %v1077, %v1080
      %vm1082 = vweird.f32 %v971
      %vm1083 = vweird.f32 %v1077
      %vm1084 = vmor %vm1082, %vm1083
      %v1085 = vsel %vm1084, %v1077, %v1081
      %v1086 = vand.u32 2147483647, %v971
      %vm1087 = vcmp.eq.f32.partialorder %v1086, 8.507059e+37
      %v1088 = vand.u32 %v971, 2147483648
      %v1089 = vor.u32 1.1754944e-38, %v1088
      %v1090 = vsel %vm1087, %v1089, %v1085
      %v1091 = vmul.f32 1.0, %v1090
      %v1092 = vrcp.pop %v974
      %v1093 = vmul.f32 %v974, %v1092
      %v1094 = vsub.f32 1.0, %v1093
      %v1095 = vmul.f32 %v1092, %v1094
      %v1096 = vadd.f32 %v1092, %v1095
      %vm1097 = vweird.f32 %v974
      %vm1098 = vweird.f32 %v1092
      %vm1099 = vmor %vm1097, %vm1098
      %v1100 = vsel %vm1099, %v1092, %v1096
      %v1101 = vand.u32 2147483647, %v974
      %vm1102 = vcmp.eq.f32.partialorder %v1101, 8.507059e+37
      %v1103 = vand.u32 %v974, 2147483648
      %v1104 = vor.u32 1.1754944e-38, %v1103
      %v1105 = vsel %vm1102, %v1104, %v1100
      %v1106 = vmul.f32 1.0, %v1105
      %v1107 = vrcp.pop %v977
      %v1108 = vmul.f32 %v977, %v1107
      %v1109 = vsub.f32 1.0, %v1108
      %v1110 = vmul.f32 %v1107, %v1109
      %v1111 = vadd.f32 %v1107, %v1110
      %vm1112 = vweird.f32 %v977
      %vm1113 = vweird.f32 %v1107
      %vm1114 = vmor %vm1112, %vm1113
      %v1115 = vsel %vm1114, %v1107, %v1111
      %v1116 = vand.u32 2147483647, %v977
      %vm1117 = vcmp.eq.f32.partialorder %v1116, 8.507059e+37
      %v1118 = vand.u32 %v977, 2147483648
      %v1119 = vor.u32 1.1754944e-38, %v1118
      %v1120 = vsel %vm1117, %v1119, %v1115
      %v1121 = vmul.f32 1.0, %v1120
      %v1122 = vrcp.pop %v980
      %v1123 = vmul.f32 %v980, %v1122
      %v1124 = vsub.f32 1.0, %v1123
      %v1125 = vmul.f32 %v1122, %v1124
      %v1126 = vadd.f32 %v1122, %v1125
      %vm1127 = vweird.f32 %v980
      %vm1128 = vweird.f32 %v1122
      %vm1129 = vmor %vm1127, %vm1128
      %v1130 = vsel %vm1129, %v1122, %v1126
      %v1131 = vand.u32 2147483647, %v980
      %vm1132 = vcmp.eq.f32.partialorder %v1131, 8.507059e+37
      %v1133 = vand.u32 %v980, 2147483648
      %v1134 = vor.u32 1.1754944e-38, %v1133
      %v1135 = vsel %vm1132, %v1134, %v1130
      %v1136 = vmul.f32 1.0, %v1135
      %v1137 = vrcp.pop %v983
      %v1138 = vmul.f32 %v983, %v1137
      %v1139 = vsub.f32 1.0, %v1138
      %v1140 = vmul.f32 %v1137, %v1139
      %v1141 = vadd.f32 %v1137, %v1140
      %vm1142 = vweird.f32 %v983
      %vm1143 = vweird.f32 %v1137
      %vm1144 = vmor %vm1142, %vm1143
      %v1145 = vsel %vm1144, %v1137, %v1141
      %v1146 = vand.u32 2147483647, %v983
      %vm1147 = vcmp.eq.f32.partialorder %v1146, 8.507059e+37
      %v1148 = vand.u32 %v983, 2147483648
      %v1149 = vor.u32 1.1754944e-38, %v1148
      %v1150 = vsel %vm1147, %v1149, %v1145
      %v1151 = vmul.f32 1.0, %v1150
      %v1152 = vrcp.pop %v986
      %v1153 = vmul.f32 %v986, %v1152
      %v1154 = vsub.f32 1.0, %v1153
      %v1155 = vmul.f32 %v1152, %v1154
      %v1156 = vadd.f32 %v1152, %v1155
      %vm1157 = vweird.f32 %v986
      %vm1158 = vweird.f32 %v1152
      %vm1159 = vmor %vm1157, %vm1158
      %v1160 = vsel %vm1159, %v1152, %v1156
      %v1161 = vand.u32 2147483647, %v986
      %vm1162 = vcmp.eq.f32.partialorder %v1161, 8.507059e+37
      %v1163 = vand.u32 %v986, 2147483648
      %v1164 = vor.u32 1.1754944e-38, %v1163
      %v1165 = vsel %vm1162, %v1164, %v1160
      %v1166 = vmul.f32 1.0, %v1165
      %v1167 = vrcp.pop %v989
      %v1168 = vmul.f32 %v989, %v1167
      %v1169 = vsub.f32 1.0, %v1168
      %v1170 = vmul.f32 %v1167, %v1169
      %v1171 = vadd.f32 %v1167, %v1170
      %vm1172 = vweird.f32 %v989
      %vm1173 = vweird.f32 %v1167
      %vm1174 = vmor %vm1172, %vm1173
      %v1175 = vsel %vm1174, %v1167, %v1171
      %v1176 = vand.u32 2147483647, %v989
      %vm1177 = vcmp.eq.f32.partialorder %v1176, 8.507059e+37
      %v1178 = vand.u32 %v989, 2147483648
      %v1179 = vor.u32 1.1754944e-38, %v1178
      %v1180 = vsel %vm1177, %v1179, %v1175
      %v1181 = vmul.f32 1.0, %v1180
      %v1182 = vrcp.pop %v992
      %v1183 = vmul.f32 %v992, %v1182
      %v1184 = vsub.f32 1.0, %v1183
      %v1185 = vmul.f32 %v1182, %v1184
      %v1186 = vadd.f32 %v1182, %v1185
      %vm1187 = vweird.f32 %v992
      %vm1188 = vweird.f32 %v1182
      %vm1189 = vmor %vm1187, %vm1188
      %v1190 = vsel %vm1189, %v1182, %v1186
      %v1191 = vand.u32 2147483647, %v992
      %vm1192 = vcmp.eq.f32.partialorder %v1191, 8.507059e+37
      %v1193 = vand.u32 %v992, 2147483648
      %v1194 = vor.u32 1.1754944e-38, %v1193
      %v1195 = vsel %vm1192, %v1194, %v1190
      %v1196 = vmul.f32 1.0, %v1195
      %v1197 = vrcp.pop %v995
      %v1198 = vmul.f32 %v995, %v1197
      %v1199 = vsub.f32 1.0, %v1198
      %v1200 = vmul.f32 %v1197, %v1199
      %v1201 = vadd.f32 %v1197, %v1200
      %vm1202 = vweird.f32 %v995
      %vm1203 = vweird.f32 %v1197
      %vm1204 = vmor %vm1202, %vm1203
      %v1205 = vsel %vm1204, %v1197, %v1201
      %v1206 = vand.u32 2147483647, %v995
      %vm1207 = vcmp.eq.f32.partialorder %v1206, 8.507059e+37
      %v1208 = vand.u32 %v995, 2147483648
      %v1209 = vor.u32 1.1754944e-38, %v1208
      %v1210 = vsel %vm1207, %v1209, %v1205
      %v1211 = vmul.f32 1.0, %v1210
      %v1212 = vrcp.pop %v998
      %v1213 = vmul.f32 %v998, %v1212
      %v1214 = vsub.f32 1.0, %v1213
      %v1215 = vmul.f32 %v1212, %v1214
      %v1216 = vadd.f32 %v1212, %v1215
      %vm1217 = vweird.f32 %v998
      %vm1218 = vweird.f32 %v1212
      %vm1219 = vmor %vm1217, %vm1218
      %v1220 = vsel %vm1219, %v1212, %v1216
      %v1221 = vand.u32 2147483647, %v998
      %vm1222 = vcmp.eq.f32.partialorder %v1221, 8.507059e+37
      %v1223 = vand.u32 %v998, 2147483648
      %v1224 = vor.u32 1.1754944e-38, %v1223
      %v1225 = vsel %vm1222, %v1224, %v1220
      %v1226 = vmul.f32 1.0, %v1225
      %v1227 = vrcp.pop %v1001
      %v1228 = vmul.f32 %v1001, %v1227
      %v1229 = vsub.f32 1.0, %v1228
      %v1230 = vmul.f32 %v1227, %v1229
      %v1231 = vadd.f32 %v1227, %v1230
      %vm1232 = vweird.f32 %v1001
      %vm1233 = vweird.f32 %v1227
      %vm1234 = vmor %vm1232, %vm1233
      %v1235 = vsel %vm1234, %v1227, %v1231
      %v1236 = vand.u32 2147483647, %v1001
      %vm1237 = vcmp.eq.f32.partialorder %v1236, 8.507059e+37
      %v1238 = vand.u32 %v1001, 2147483648
      %v1239 = vor.u32 1.1754944e-38, %v1238
      %v1240 = vsel %vm1237, %v1239, %v1235
      %v1241 = vmul.f32 1.0, %v1240
      %v1242 = vmul.f32 %v923, %v1016
      %v1243 = vmul.f32 %v925, %v1031
      %v1244 = vmul.f32 %v927, %v1046
      %v1245 = vmul.f32 %v929, %v1061
      %v1246 = vmul.f32 %v931, %v1076
      %v1247 = vmul.f32 %v933, %v1091
      %v1248 = vmul.f32 %v935, %v1106
      %v1249 = vmul.f32 %v937, %v1121
      %v1250 = vmul.f32 %v939, %v1136
      %v1251 = vmul.f32 %v941, %v1151
      %v1252 = vmul.f32 %v943, %v1166
      %v1253 = vmul.f32 %v945, %v1181
      %v1254 = vmul.f32 %v947, %v1196
      %v1255 = vmul.f32 %v949, %v1211
      %v1256 = vmul.f32 %v951, %v1226
      %v1257 = vmul.f32 %v953, %v1241
      %v1258 = vsel %vm857, %v1242, 0.0
      %1259 = vadd.xlane.f32.xlu0 %v1258
      %v1260 = vpop.xlane.xlu0 %1259
      %v1261 = vsel %vm857, %v1243, 0.0
      %1262 = vadd.xlane.f32.xlu0 %v1261
      %v1263 = vpop.xlane.xlu0 %1262
      %v1264 = vsel %vm857, %v1244, 0.0
      %1265 = vadd.xlane.f32.xlu0 %v1264
      %v1266 = vpop.xlane.xlu0 %1265
      %v1267 = vsel %vm857, %v1245, 0.0
      %1268 = vadd.xlane.f32.xlu0 %v1267
      %v1269 = vpop.xlane.xlu0 %1268
      %v1270 = vsel %vm857, %v1246, 0.0
      %1271 = vadd.xlane.f32.xlu0 %v1270
      %v1272 = vpop.xlane.xlu0 %1271
      %v1273 = vsel %vm857, %v1247, 0.0
      %1274 = vadd.xlane.f32.xlu0 %v1273
      %v1275 = vpop.xlane.xlu0 %1274
      %v1276 = vsel %vm857, %v1248, 0.0
      %1277 = vadd.xlane.f32.xlu0 %v1276
      %v1278 = vpop.xlane.xlu0 %1277
      %v1279 = vsel %vm857, %v1249, 0.0
      %1280 = vadd.xlane.f32.xlu0 %v1279
      %v1281 = vpop.xlane.xlu0 %1280
      %v1282 = vsel %vm857, %v1250, 0.0
      %1283 = vadd.xlane.f32.xlu0 %v1282
      %v1284 = vpop.xlane.xlu0 %1283
      %v1285 = vsel %vm857, %v1251, 0.0
      %1286 = vadd.xlane.f32.xlu0 %v1285
      %v1287 = vpop.xlane.xlu0 %1286
      %v1288 = vsel %vm857, %v1252, 0.0
      %1289 = vadd.xlane.f32.xlu0 %v1288
      %v1290 = vpop.xlane.xlu0 %1289
      %v1291 = vsel %vm857, %v1253, 0.0
      %1292 = vadd.xlane.f32.xlu0 %v1291
      %v1293 = vpop.xlane.xlu0 %1292
      %v1294 = vsel %vm857, %v1254, 0.0
      %1295 = vadd.xlane.f32.xlu0 %v1294
      %v1296 = vpop.xlane.xlu0 %1295
      %v1297 = vsel %vm857, %v1255, 0.0
      %1298 = vadd.xlane.f32.xlu0 %v1297
      %v1299 = vpop.xlane.xlu0 %1298
      %v1300 = vsel %vm857, %v1256, 0.0
      %1301 = vadd.xlane.f32.xlu0 %v1300
      %v1302 = vpop.xlane.xlu0 %1301
      %v1303 = vsel %vm857, %v1257, 0.0
      %1304 = vadd.xlane.f32.xlu0 %v1303
      %v1305 = vpop.xlane.xlu0 %1304
      %v1306 = vrcp.pop %v1260
      %v1307 = vmul.f32 %v1260, %v1306
      %v1308 = vsub.f32 1.0, %v1307
      %v1309 = vmul.f32 %v1306, %v1308
      %v1310 = vadd.f32 %v1306, %v1309
      %vm1311 = vweird.f32 %v1260
      %vm1312 = vweird.f32 %v1306
      %vm1313 = vmor %vm1311, %vm1312
      %v1314 = vsel %vm1313, %v1306, %v1310
      %v1315 = vand.u32 2147483647, %v1260
      %vm1316 = vcmp.eq.f32.partialorder %v1315, 8.507059e+37
      %v1317 = vand.u32 %v1260, 2147483648
      %v1318 = vor.u32 1.1754944e-38, %v1317
      %v1319 = vsel %vm1316, %v1318, %v1314
      %v1320 = vmul.f32 1.0, %v1319
      %v1321 = vrcp.pop %v1263
      %v1322 = vmul.f32 %v1263, %v1321
      %v1323 = vsub.f32 1.0, %v1322
      %v1324 = vmul.f32 %v1321, %v1323
      %v1325 = vadd.f32 %v1321, %v1324
      %vm1326 = vweird.f32 %v1263
      %vm1327 = vweird.f32 %v1321
      %vm1328 = vmor %vm1326, %vm1327
      %v1329 = vsel %vm1328, %v1321, %v1325
      %v1330 = vand.u32 2147483647, %v1263
      %vm1331 = vcmp.eq.f32.partialorder %v1330, 8.507059e+37
      %v1332 = vand.u32 %v1263, 2147483648
      %v1333 = vor.u32 1.1754944e-38, %v1332
      %v1334 = vsel %vm1331, %v1333, %v1329
      %v1335 = vmul.f32 1.0, %v1334
      %v1336 = vrcp.pop %v1266
      %v1337 = vmul.f32 %v1266, %v1336
      %v1338 = vsub.f32 1.0, %v1337
      %v1339 = vmul.f32 %v1336, %v1338
      %v1340 = vadd.f32 %v1336, %v1339
      %vm1341 = vweird.f32 %v1266
      %vm1342 = vweird.f32 %v1336
      %vm1343 = vmor %vm1341, %vm1342
      %v1344 = vsel %vm1343, %v1336, %v1340
      %v1345 = vand.u32 2147483647, %v1266
      %vm1346 = vcmp.eq.f32.partialorder %v1345, 8.507059e+37
      %v1347 = vand.u32 %v1266, 2147483648
      %v1348 = vor.u32 1.1754944e-38, %v1347
      %v1349 = vsel %vm1346, %v1348, %v1344
      %v1350 = vmul.f32 1.0, %v1349
      %v1351 = vrcp.pop %v1269
      %v1352 = vmul.f32 %v1269, %v1351
      %v1353 = vsub.f32 1.0, %v1352
      %v1354 = vmul.f32 %v1351, %v1353
      %v1355 = vadd.f32 %v1351, %v1354
      %vm1356 = vweird.f32 %v1269
      %vm1357 = vweird.f32 %v1351
      %vm1358 = vmor %vm1356, %vm1357
      %v1359 = vsel %vm1358, %v1351, %v1355
      %v1360 = vand.u32 2147483647, %v1269
      %vm1361 = vcmp.eq.f32.partialorder %v1360, 8.507059e+37
      %v1362 = vand.u32 %v1269, 2147483648
      %v1363 = vor.u32 1.1754944e-38, %v1362
      %v1364 = vsel %vm1361, %v1363, %v1359
      %v1365 = vmul.f32 1.0, %v1364
      %v1366 = vrcp.pop %v1272
      %v1367 = vmul.f32 %v1272, %v1366
      %v1368 = vsub.f32 1.0, %v1367
      %v1369 = vmul.f32 %v1366, %v1368
      %v1370 = vadd.f32 %v1366, %v1369
      %vm1371 = vweird.f32 %v1272
      %vm1372 = vweird.f32 %v1366
      %vm1373 = vmor %vm1371, %vm1372
      %v1374 = vsel %vm1373, %v1366, %v1370
      %v1375 = vand.u32 2147483647, %v1272
      %vm1376 = vcmp.eq.f32.partialorder %v1375, 8.507059e+37
      %v1377 = vand.u32 %v1272, 2147483648
      %v1378 = vor.u32 1.1754944e-38, %v1377
      %v1379 = vsel %vm1376, %v1378, %v1374
      %v1380 = vmul.f32 1.0, %v1379
      %v1381 = vrcp.pop %v1275
      %v1382 = vmul.f32 %v1275, %v1381
      %v1383 = vsub.f32 1.0, %v1382
      %v1384 = vmul.f32 %v1381, %v1383
      %v1385 = vadd.f32 %v1381, %v1384
      %vm1386 = vweird.f32 %v1275
      %vm1387 = vweird.f32 %v1381
      %vm1388 = vmor %vm1386, %vm1387
      %v1389 = vsel %vm1388, %v1381, %v1385
      %v1390 = vand.u32 2147483647, %v1275
      %vm1391 = vcmp.eq.f32.partialorder %v1390, 8.507059e+37
      %v1392 = vand.u32 %v1275, 2147483648
      %v1393 = vor.u32 1.1754944e-38, %v1392
      %v1394 = vsel %vm1391, %v1393, %v1389
      %v1395 = vmul.f32 1.0, %v1394
      %v1396 = vrcp.pop %v1278
      %v1397 = vmul.f32 %v1278, %v1396
      %v1398 = vsub.f32 1.0, %v1397
      %v1399 = vmul.f32 %v1396, %v1398
      %v1400 = vadd.f32 %v1396, %v1399
      %vm1401 = vweird.f32 %v1278
      %vm1402 = vweird.f32 %v1396
      %vm1403 = vmor %vm1401, %vm1402
      %v1404 = vsel %vm1403, %v1396, %v1400
      %v1405 = vand.u32 2147483647, %v1278
      %vm1406 = vcmp.eq.f32.partialorder %v1405, 8.507059e+37
      %v1407 = vand.u32 %v1278, 2147483648
      %v1408 = vor.u32 1.1754944e-38, %v1407
      %v1409 = vsel %vm1406, %v1408, %v1404
      %v1410 = vmul.f32 1.0, %v1409
      %v1411 = vrcp.pop %v1281
      %v1412 = vmul.f32 %v1281, %v1411
      %v1413 = vsub.f32 1.0, %v1412
      %v1414 = vmul.f32 %v1411, %v1413
      %v1415 = vadd.f32 %v1411, %v1414
      %vm1416 = vweird.f32 %v1281
      %vm1417 = vweird.f32 %v1411
      %vm1418 = vmor %vm1416, %vm1417
      %v1419 = vsel %vm1418, %v1411, %v1415
      %v1420 = vand.u32 2147483647, %v1281
      %vm1421 = vcmp.eq.f32.partialorder %v1420, 8.507059e+37
      %v1422 = vand.u32 %v1281, 2147483648
      %v1423 = vor.u32 1.1754944e-38, %v1422
      %v1424 = vsel %vm1421, %v1423, %v1419
      %v1425 = vmul.f32 1.0, %v1424
      %v1426 = vrcp.pop %v1284
      %v1427 = vmul.f32 %v1284, %v1426
      %v1428 = vsub.f32 1.0, %v1427
      %v1429 = vmul.f32 %v1426, %v1428
      %v1430 = vadd.f32 %v1426, %v1429
      %vm1431 = vweird.f32 %v1284
      %vm1432 = vweird.f32 %v1426
      %vm1433 = vmor %vm1431, %vm1432
      %v1434 = vsel %vm1433, %v1426, %v1430
      %v1435 = vand.u32 2147483647, %v1284
      %vm1436 = vcmp.eq.f32.partialorder %v1435, 8.507059e+37
      %v1437 = vand.u32 %v1284, 2147483648
      %v1438 = vor.u32 1.1754944e-38, %v1437
      %v1439 = vsel %vm1436, %v1438, %v1434
      %v1440 = vmul.f32 1.0, %v1439
      %v1441 = vrcp.pop %v1287
      %v1442 = vmul.f32 %v1287, %v1441
      %v1443 = vsub.f32 1.0, %v1442
      %v1444 = vmul.f32 %v1441, %v1443
      %v1445 = vadd.f32 %v1441, %v1444
      %vm1446 = vweird.f32 %v1287
      %vm1447 = vweird.f32 %v1441
      %vm1448 = vmor %vm1446, %vm1447
      %v1449 = vsel %vm1448, %v1441, %v1445
      %v1450 = vand.u32 2147483647, %v1287
      %vm1451 = vcmp.eq.f32.partialorder %v1450, 8.507059e+37
      %v1452 = vand.u32 %v1287, 2147483648
      %v1453 = vor.u32 1.1754944e-38, %v1452
      %v1454 = vsel %vm1451, %v1453, %v1449
      %v1455 = vmul.f32 1.0, %v1454
      %v1456 = vrcp.pop %v1290
      %v1457 = vmul.f32 %v1290, %v1456
      %v1458 = vsub.f32 1.0, %v1457
      %v1459 = vmul.f32 %v1456, %v1458
      %v1460 = vadd.f32 %v1456, %v1459
      %vm1461 = vweird.f32 %v1290
      %vm1462 = vweird.f32 %v1456
      %vm1463 = vmor %vm1461, %vm1462
      %v1464 = vsel %vm1463, %v1456, %v1460
      %v1465 = vand.u32 2147483647, %v1290
      %vm1466 = vcmp.eq.f32.partialorder %v1465, 8.507059e+37
      %v1467 = vand.u32 %v1290, 2147483648
      %v1468 = vor.u32 1.1754944e-38, %v1467
      %v1469 = vsel %vm1466, %v1468, %v1464
      %v1470 = vmul.f32 1.0, %v1469
      %v1471 = vrcp.pop %v1293
      %v1472 = vmul.f32 %v1293, %v1471
      %v1473 = vsub.f32 1.0, %v1472
      %v1474 = vmul.f32 %v1471, %v1473
      %v1475 = vadd.f32 %v1471, %v1474
      %vm1476 = vweird.f32 %v1293
      %vm1477 = vweird.f32 %v1471
      %vm1478 = vmor %vm1476, %vm1477
      %v1479 = vsel %vm1478, %v1471, %v1475
      %v1480 = vand.u32 2147483647, %v1293
      %vm1481 = vcmp.eq.f32.partialorder %v1480, 8.507059e+37
      %v1482 = vand.u32 %v1293, 2147483648
      %v1483 = vor.u32 1.1754944e-38, %v1482
      %v1484 = vsel %vm1481, %v1483, %v1479
      %v1485 = vmul.f32 1.0, %v1484
      %v1486 = vrcp.pop %v1296
      %v1487 = vmul.f32 %v1296, %v1486
      %v1488 = vsub.f32 1.0, %v1487
      %v1489 = vmul.f32 %v1486, %v1488
      %v1490 = vadd.f32 %v1486, %v1489
      %vm1491 = vweird.f32 %v1296
      %vm1492 = vweird.f32 %v1486
      %vm1493 = vmor %vm1491, %vm1492
      %v1494 = vsel %vm1493, %v1486, %v1490
      %v1495 = vand.u32 2147483647, %v1296
      %vm1496 = vcmp.eq.f32.partialorder %v1495, 8.507059e+37
      %v1497 = vand.u32 %v1296, 2147483648
      %v1498 = vor.u32 1.1754944e-38, %v1497
      %v1499 = vsel %vm1496, %v1498, %v1494
      %v1500 = vmul.f32 1.0, %v1499
      %v1501 = vrcp.pop %v1299
      %v1502 = vmul.f32 %v1299, %v1501
      %v1503 = vsub.f32 1.0, %v1502
      %v1504 = vmul.f32 %v1501, %v1503
      %v1505 = vadd.f32 %v1501, %v1504
      %vm1506 = vweird.f32 %v1299
      %vm1507 = vweird.f32 %v1501
      %vm1508 = vmor %vm1506, %vm1507
      %v1509 = vsel %vm1508, %v1501, %v1505
      %v1510 = vand.u32 2147483647, %v1299
      %vm1511 = vcmp.eq.f32.partialorder %v1510, 8.507059e+37
      %v1512 = vand.u32 %v1299, 2147483648
      %v1513 = vor.u32 1.1754944e-38, %v1512
      %v1514 = vsel %vm1511, %v1513, %v1509
      %v1515 = vmul.f32 1.0, %v1514
      %v1516 = vrcp.pop %v1302
      %v1517 = vmul.f32 %v1302, %v1516
      %v1518 = vsub.f32 1.0, %v1517
      %v1519 = vmul.f32 %v1516, %v1518
      %v1520 = vadd.f32 %v1516, %v1519
      %vm1521 = vweird.f32 %v1302
      %vm1522 = vweird.f32 %v1516
      %vm1523 = vmor %vm1521, %vm1522
      %v1524 = vsel %vm1523, %v1516, %v1520
      %v1525 = vand.u32 2147483647, %v1302
      %vm1526 = vcmp.eq.f32.partialorder %v1525, 8.507059e+37
      %v1527 = vand.u32 %v1302, 2147483648
      %v1528 = vor.u32 1.1754944e-38, %v1527
      %v1529 = vsel %vm1526, %v1528, %v1524
      %v1530 = vmul.f32 1.0, %v1529
      %v1531 = vrcp.pop %v1305
      %v1532 = vmul.f32 %v1305, %v1531
      %v1533 = vsub.f32 1.0, %v1532
      %v1534 = vmul.f32 %v1531, %v1533
      %v1535 = vadd.f32 %v1531, %v1534
      %vm1536 = vweird.f32 %v1305
      %vm1537 = vweird.f32 %v1531
      %vm1538 = vmor %vm1536, %vm1537
      %v1539 = vsel %vm1538, %v1531, %v1535
      %v1540 = vand.u32 2147483647, %v1305
      %vm1541 = vcmp.eq.f32.partialorder %v1540, 8.507059e+37
      %v1542 = vand.u32 %v1305, 2147483648
      %v1543 = vor.u32 1.1754944e-38, %v1542
      %v1544 = vsel %vm1541, %v1543, %v1539
      %v1545 = vmul.f32 1.0, %v1544
      %v1546 = vmul.f32 %v1242, %v1320
      %v1547 = vmul.f32 %v1243, %v1335
      %v1548 = vmul.f32 %v1244, %v1350
      %v1549 = vmul.f32 %v1245, %v1365
      %v1550 = vmul.f32 %v1246, %v1380
      %v1551 = vmul.f32 %v1247, %v1395
      %v1552 = vmul.f32 %v1248, %v1410
      %v1553 = vmul.f32 %v1249, %v1425
      %v1554 = vmul.f32 %v1250, %v1440
      %v1555 = vmul.f32 %v1251, %v1455
      %v1556 = vmul.f32 %v1252, %v1470
      %v1557 = vmul.f32 %v1253, %v1485
      %v1558 = vmul.f32 %v1254, %v1500
      %v1559 = vmul.f32 %v1255, %v1515
      %v1560 = vmul.f32 %v1256, %v1530
      %v1561 = vmul.f32 %v1257, %v1545
      %v1562 = vld [vmem:[%s3] sm:$0xff]
      %v1563 = vld [vmem:[%s3 + $0x8] sm:$0xff]
      %v1564 = vld [vmem:[%s3 + $0x10] sm:$0xff]
      %v1565 = vld [vmem:[%s3 + $0x18] sm:$0xff]
      %v1566 = vld [vmem:[%s3 + $0x20] sm:$0xff]
      %v1567 = vld [vmem:[%s3 + $0x28] sm:$0xff]
      %v1568 = vld [vmem:[%s3 + $0x30] sm:$0xff]
      %v1569 = vld [vmem:[%s3 + $0x38] sm:$0xff]
      %v1571 = vsel %vm857, %v1546, 0
      %v1574 = vsel %vm857, %v1547, 0
      %v1577 = vsel %vm857, %v1548, 0
      %v1580 = vsel %vm857, %v1549, 0
      %v1583 = vsel %vm857, %v1550, 0
      %v1586 = vsel %vm857, %v1551, 0
      %v1589 = vsel %vm857, %v1552, 0
      %v1592 = vsel %vm857, %v1553, 0
      %v1595 = vsel %vm857, %v1554, 0
      %v1598 = vsel %vm857, %v1555, 0
      %v1601 = vsel %vm857, %v1556, 0
      %v1604 = vsel %vm857, %v1557, 0
      %v1607 = vsel %vm857, %v1558, 0
      %v1610 = vsel %vm857, %v1559, 0
      %v1613 = vsel %vm857, %v1560, 0
      %v1616 = vsel %vm857, %v1561, 0
      %1618 = vmatpush.msra.mxu0 0.0
      %1619 = vmatpush.msra.mxu0 0.0
      %1620 = vmatpush.msra.mxu0 0.0
      %1621 = vmatpush.msra.mxu0 0.0
      %1622 = vmatpush.msra.mxu0 0.0
      %1623 = vmatpush.msra.mxu0 0.0
      %1624 = vmatpush.msra.mxu0 0.0
      %1625 = vmatpush.msra.mxu0 0.0
      %1626 = vmatpush.msra.mxu0 %v1569
      %1627 = vmatpush.msra.mxu0 %v1568
      %1628 = vmatpush.msra.mxu0 %v1567
      %1629 = vmatpush.msra.mxu0 %v1566
      %1630 = vmatpush.msra.mxu0 %v1565
      %1631 = vmatpush.msra.mxu0 %v1564
      %1632 = vmatpush.msra.mxu0 %v1563
      %1633 = vmatpush.msra.mxu0 %v1562
      %1634 = vmatmul.f32.gmra.mxu0 %v1571
      %v1635 = vpop.f32.mrf.mxu0
      %v1636 = vadd.f32 0.0, %v1635
      %1637 = vmatmul.f32.gmra.mxu0 %v1574
      %v1638 = vpop.f32.mrf.mxu0
      %v1639 = vadd.f32 0.0, %v1638
      %1640 = vmatmul.f32.gmra.mxu0 %v1577
      %v1641 = vpop.f32.mrf.mxu0
      %v1642 = vadd.f32 0.0, %v1641
      %1643 = vmatmul.f32.gmra.mxu0 %v1580
      %v1644 = vpop.f32.mrf.mxu0
      %v1645 = vadd.f32 0.0, %v1644
      %1646 = vmatmul.f32.gmra.mxu0 %v1583
      %v1647 = vpop.f32.mrf.mxu0
      %v1648 = vadd.f32 0.0, %v1647
      %1649 = vmatmul.f32.gmra.mxu0 %v1586
      %v1650 = vpop.f32.mrf.mxu0
      %v1651 = vadd.f32 0.0, %v1650
      %1652 = vmatmul.f32.gmra.mxu0 %v1589
      %v1653 = vpop.f32.mrf.mxu0
      %v1654 = vadd.f32 0.0, %v1653
      %1655 = vmatmul.f32.gmra.mxu0 %v1592
      %v1656 = vpop.f32.mrf.mxu0
      %v1657 = vadd.f32 0.0, %v1656
      %1658 = vmatmul.f32.gmra.mxu0 %v1595
      %v1659 = vpop.f32.mrf.mxu0
      %v1660 = vadd.f32 0.0, %v1659
      %1661 = vmatmul.f32.gmra.mxu0 %v1598
      %v1662 = vpop.f32.mrf.mxu0
      %v1663 = vadd.f32 0.0, %v1662
      %1664 = vmatmul.f32.gmra.mxu0 %v1601
      %v1665 = vpop.f32.mrf.mxu0
      %v1666 = vadd.f32 0.0, %v1665
      %1667 = vmatmul.f32.gmra.mxu0 %v1604
      %v1668 = vpop.f32.mrf.mxu0
      %v1669 = vadd.f32 0.0, %v1668
      %1670 = vmatmul.f32.gmra.mxu0 %v1607
      %v1671 = vpop.f32.mrf.mxu0
      %v1672 = vadd.f32 0.0, %v1671
      %1673 = vmatmul.f32.gmra.mxu0 %v1610
      %v1674 = vpop.f32.mrf.mxu0
      %v1675 = vadd.f32 0.0, %v1674
      %1676 = vmatmul.f32.gmra.mxu0 %v1613
      %v1677 = vpop.f32.mrf.mxu0
      %v1678 = vadd.f32 0.0, %v1677
      %1679 = vmatmul.f32.gmra.mxu0 %v1616
      %v1680 = vpop.f32.mrf.mxu0
      %v1681 = vadd.f32 0.0, %v1680
      %1682 = vdwg.mxu0
      %vm1683 = vcmask 31744
      %1684 = vst.msk [vmem:[%s249] sm:$0xff] %vm1683, %v1636
      %1685 = vst.msk [vmem:[%s249 + $0x8] sm:$0xff] %vm1683, %v1639
      %1686 = vst.msk [vmem:[%s249 + $0x10] sm:$0xff] %vm1683, %v1642
      %1687 = vst.msk [vmem:[%s249 + $0x18] sm:$0xff] %vm1683, %v1645
      %1688 = vst.msk [vmem:[%s249 + $0x20] sm:$0xff] %vm1683, %v1648
      %1689 = vst.msk [vmem:[%s249 + $0x28] sm:$0xff] %vm1683, %v1651
      %1690 = vst.msk [vmem:[%s249 + $0x30] sm:$0xff] %vm1683, %v1654
      %1691 = vst.msk [vmem:[%s249 + $0x38] sm:$0xff] %vm1683, %v1657
      %1692 = vst.msk [vmem:[%s249 + $0x40] sm:$0xff] %vm1683, %v1660
      %1693 = vst.msk [vmem:[%s249 + $0x48] sm:$0xff] %vm1683, %v1663
      %1694 = vst.msk [vmem:[%s249 + $0x50] sm:$0xff] %vm1683, %v1666
      %1695 = vst.msk [vmem:[%s249 + $0x58] sm:$0xff] %vm1683, %v1669
      %1696 = vst.msk [vmem:[%s249 + $0x60] sm:$0xff] %vm1683, %v1672
      %1697 = vst.msk [vmem:[%s249 + $0x68] sm:$0xff] %vm1683, %v1675
      %1698 = vst.msk [vmem:[%s249 + $0x70] sm:$0xff] %vm1683, %v1678
      %1699 = vst.msk [vmem:[%s249 + $0x78] sm:$0xff] %vm1683, %v1681
      %s1700 = smul.u32 16, %s20
      %p1701 = scmp.lt.s32.totalorder %s19, 1
      %s1702 = scalar_select %p1701, %s19, 1
      %p1703 = scmp.lt.s32.totalorder %s1700, 31
      %s1704 = scalar_select %p1703, %s1700, 31
      %s1705 = smul.addr %s1702, 32
      %s1706 = sadd.s32 %s1704, %s1705
      %s1707 = smul.addr %s1706, 8
      %s1708 = scalar_lea.vmem %s4, %s1707
      // Predicated region
      $region37: #{gcea_block.3} parent=35 // pred_check
        %p1709 = pneg %p143
      $region38: #{gcea_block.3} parent=35 // pred_check_branch
        %1711 = sbr.rel (%p1709) target = $region40
      $region39: #{gcea_block.3} parent=35 // pred_region
        %s1712 = smul.u32 16, %s20
      $region40: #{gcea_block.3} parent=35 // pred_fallthru
        _
    $region36: #{gcea_block.3} parent=5 // pred_fallthru
      _
    %p1713 = scmp.le.s32.totalorder 2, %s10
    // Predicated region
    $region41: #{gcea_block.3} parent=5 // pred_check
      %p1714 = pneg %p1713
    $region42: #{gcea_block.3} parent=5 // pred_check_branch
      %1716 = sbr.rel (%p1714) target = $region44
    $region43: #{gcea_block.3} parent=5 // pred_region
      %s1717 = ssub.s32 %s10, 2
      // Predicated region
      $region45: #{gcea_block.3} parent=43 // pred_check
        %p1718 = pneg %p149
      $region46: #{gcea_block.3} parent=43 // pred_check_branch
        %1720 = sbr.rel (%p1718) target = $region48
      $region47: #{gcea_block.3} parent=43 // pred_region
        %s1721 = smul.u32 16, %s22
        %p1722 = scmp.lt.s32.totalorder %s21, 1
        %s1723 = scalar_select %p1722, %s21, 1
        %p1724 = scmp.lt.s32.totalorder %s1721, 31
        %s1725 = scalar_select %p1724, %s1721, 31
        %s1726 = smul.addr %s1723, 32
        %s1727 = sadd.s32 %s1725, %s1726
        %s1728 = smul.addr %s1727, 8
        %s1729 = scalar_lea.vmem %s4, %s1728
      $region48: #{gcea_block.3} parent=43 // pred_fallthru
        _
    $region44: #{gcea_block.3} parent=5 // pred_fallthru
      _
  $region6: #{gcea_block.3} parent=0 // loop_footer
    %s14 = sadd.s32 1, %s10
  $region7: #{gcea_block.3} parent=0 // loop_footer_branch
    %9 = sbr.rel target = $region3
  $region8: #{gcea_block.3} parent=0 // loop_exit
    _

</llo_original>
